<compile_context>
chip_gen: v6e
topology: v6e:2x2x1
jax: 0.10.0
libtpu: 0.0.40
codegen_flags: <defaults>
</compile_context>

<pallas_src>
import functools

import jax
import jax.numpy as jnp
from jax.experimental import pallas as pl
from jax.experimental.pallas import tpu as pltpu


def _maxpool2x2(t):
    """MaxPool2d(kernel_size=2), floor mode (matches PyTorch), on NHWC."""
    # Reshape-split + select is the proven-to-lower formulation; the pooled
    # tensors are tiny next to the 1x1-conv matmuls, so any relayout is cheap.
    N, H, W, C = t.shape
    H2, W2 = H // 2, W // 2
    t = t[:, : 2 * H2, : 2 * W2, :]
    tw = t.reshape(N, 2 * H2, W2, 2, C)
    t = jnp.maximum(tw[:, :, :, 0, :], tw[:, :, :, 1, :])      # (N, 2*H2, W2, C)
    th = t.reshape(N, H2, 2, W2, C)
    t = jnp.maximum(th[:, :, 0, :, :], th[:, :, 1, :, :])      # (N, H2, W2, C)
    return t


def _bf16_matmul(a, w):
    """bf16 MXU matmul with f32 accumulation."""
    return jnp.dot(a.astype(jnp.bfloat16), w, preferred_element_type=jnp.float32)


def age_gender_head_kernel(
    x_ref,                       # (NB, H, W, Cin) f32  backbone feature block (NHWC)
    w1_ref,                      # (Cin, C1)   bf16  conv_1 (1x1, no bias)
    w2_ref,                      # (C1, C2)    bf16  conv_2 (1x1, no bias)
    fc1_w_ref, fc1_b_ref,        # (C2*H4*W4, F1) bf16, (1, F1) f32
    age_w_ref, age_b_ref,        # (F1, A_pad) bf16, (1, A_pad) f32
    fc2_w_ref, fc2_b_ref,        # (Cin, F2)   bf16 (pre-scaled by 1/(H*W)), (1, F2) f32
    gen_w_ref, gen_b_ref,        # (F2, G_pad) bf16, (1, G_pad) f32
    age_out_ref,                 # (NB, A_pad) f32
    gen_out_ref,                 # (NB, G_pad) f32
):
    x = x_ref[...]
    NB, H, W, Cin = x.shape
    H2, W2 = H // 2, W // 2
    H4, W4 = H2 // 2, W2 // 2
    HC, WC = 4 * H4, 4 * W4      # spatial window that survives both floor pools

    # ---------------- age branch ----------------
    # Crop to the surviving window BEFORE conv_1 (bit-identical result; conv_1
    # is a per-pixel 1x1 so it commutes with the crop).
    xa = x[:, :HC, :WC, :]
    h = jnp.maximum(_bf16_matmul(xa.reshape(NB * HC * WC, Cin), w1_ref[...]), 0.0)
    C1 = h.shape[-1]
    h = _maxpool2x2(h.reshape(NB, HC, WC, C1))                  # (NB, 2*H4, 2*W4, C1)

    h = jnp.maximum(
        _bf16_matmul(h.reshape(NB * 2 * H4 * 2 * W4, C1), w2_ref[...]), 0.0)
    C2 = h.shape[-1]
    h = _maxpool2x2(h.reshape(NB, 2 * H4, 2 * W4, C2))          # (NB, H4, W4, C2)

    # PyTorch .view(N, -1) flattens in NCHW order.
    if H4 == 1 and W4 == 1:
        flat = h.reshape(NB, C2)
    else:
        flat = jnp.transpose(h, (0, 3, 1, 2)).reshape(NB, C2 * H4 * W4)

    a = _bf16_matmul(flat, fc1_w_ref[...]) + fc1_b_ref[...]     # fc_1 (no activation)
    age = _bf16_matmul(a, age_w_ref[...]) + age_b_ref[...]      # age_cls_pred
    age_out_ref[...] = age.astype(age_out_ref.dtype)            # full 128-lane store

    # ---------------- gender branch ----------------
    # AdaptiveAvgPool2d(1): spatial sum here; the 1/(H*W) scale is folded into
    # fc2_w on the host.
    g = jnp.sum(x, axis=(1, 2))                                  # (NB, Cin) f32
    g = _bf16_matmul(g, fc2_w_ref[...]) + fc2_b_ref[...]         # fc_2
    gen = _bf16_matmul(g, gen_w_ref[...]) + gen_b_ref[...]       # gen_cls_pred
    gen_out_ref[...] = gen.astype(gen_out_ref.dtype)             # full 128-lane store


def age_gender_head(x_nhwc, params, *, num_age_classes=101, num_gender_classes=2,
                    block_n=8):
    """x_nhwc: (N, H, W, Cin) f32 backbone feature map (NHWC layout — avoids a
    standalone NCHW->NHWC transpose pass over HBM). Returns (age, gender)."""
    N, H, W, Cin = x_nhwc.shape
    assert H >= 4 and W >= 4, "need at least a 4x4 map for the two 2x2 pools"

    A_pad = params["age_w"].shape[-1]
    G_pad = params["gen_w"].shape[-1]

    # Batch block: block_n should stay a multiple of 8 (sublane) when N > block_n.
    NB = N if N <= block_n else block_n
    n_blocks = pl.cdiv(N, NB)
    n_pad = n_blocks * NB
    if n_pad != N:
        x_nhwc = jnp.pad(x_nhwc, ((0, n_pad - N), (0, 0), (0, 0), (0, 0)))

    weight_args = (
        params["w1"], params["w2"],
        params["fc1_w"], params["fc1_b"],
        params["age_w"], params["age_b"],
        params["fc2_w"], params["fc2_b"],
        params["gen_w"], params["gen_b"],
    )

    # Weights: full-array blocks, constant index_map -> DMA'd once, resident.
    weight_specs = [pl.BlockSpec(p.shape, lambda i: (0, 0)) for p in weight_args]
    x_spec = pl.BlockSpec((NB, H, W, Cin), lambda i: (i, 0, 0, 0))
    age_spec = pl.BlockSpec((NB, A_pad), lambda i: (i, 0))
    gen_spec = pl.BlockSpec((NB, G_pad), lambda i: (i, 0))

    # Explicit scoped-VMEM budget: resident weights + double-buffered x block
    # + outputs + activation headroom, clamped to the v7x physical 64 MiB.
    weight_bytes = sum(int(p.size) * p.dtype.itemsize for p in weight_args)
    x_block_bytes = NB * H * W * Cin * x_nhwc.dtype.itemsize
    out_block_bytes = NB * (A_pad + G_pad) * 4
    est = 2 * weight_bytes + 4 * x_block_bytes + 4 * out_block_bytes + (8 << 20)
    vmem_limit = int(min(64 * 1024 * 1024, max(16 * 1024 * 1024, est)))

    age_p, gen_p = pl.pallas_call(
        age_gender_head_kernel,
        grid=(n_blocks,),
        in_specs=[x_spec] + weight_specs,
        out_specs=(age_spec, gen_spec),
        out_shape=(
            jax.ShapeDtypeStruct((n_pad, A_pad), jnp.float32),
            jax.ShapeDtypeStruct((n_pad, G_pad), jnp.float32),
        ),
        compiler_params=pltpu.CompilerParams(
            dimension_semantics=("parallel",),      # shards batch across v7x's 2 TCs
            vmem_limit_bytes=vmem_limit,
        ),
    )(x_nhwc, *weight_args)

    return age_p[:N, :num_age_classes], gen_p[:N, :num_gender_classes]


# ----------------------------- parameter helpers -----------------------------

def init_params(key, cin, c1, c2, fc1_out, num_classes, fc2_out, h, w):
    """Synthetic f32 params mirroring the PyTorch module, stored as (in, out)."""
    h4, w4 = (h // 2) // 2, (w // 2) // 2
    fc1_in = c2 * h4 * w4
    ks = jax.random.split(key, 10)
    s = 0.05
    return {
        "w1":    s * jax.random.normal(ks[0], (cin, c1), jnp.float32),
        "w2":    s * jax.random.normal(ks[1], (c1, c2), jnp.float32),
        "fc1_w": s * jax.random.normal(ks[2], (fc1_in, fc1_out), jnp.float32),
        "fc1_b": s * jax.random.normal(ks[3], (1, fc1_out), jnp.float32),
        "age_w": s * jax.random.normal(ks[4], (fc1_out, num_classes), jnp.float32),
        "age_b": s * jax.random.normal(ks[5], (1, num_classes), jnp.float32),
        "fc2_w": s * jax.random.normal(ks[6], (cin, fc2_out), jnp.float32),
        "fc2_b": s * jax.random.normal(ks[7], (1, fc2_out), jnp.float32),
        "gen_w": s * jax.random.normal(ks[8], (fc2_out, 2), jnp.float32),
        "gen_b": s * jax.random.normal(ks[9], (1, 2), jnp.float32),
    }


def _pad_cols(a, target):
    pad = target - a.shape[-1]
    if pad <= 0:
        return a
    return jnp.pad(a, [(0, 0)] * (a.ndim - 1) + [(0, pad)])


def prepare_params(raw, h, w, lane=128):
    """Kernel-ready params: bf16 matmul weights (half the DMA, bf16 MXU path),
    AdaptiveAvgPool 1/(H*W) folded into fc2_w, classifier columns zero-padded to
    128 lanes for unmasked output stores. Biases stay f32."""
    a_pad = -(-raw["age_w"].shape[-1] // lane) * lane
    g_pad = -(-raw["gen_w"].shape[-1] // lane) * lane
    return {
        "w1":    raw["w1"].astype(jnp.bfloat16),
        "w2":    raw["w2"].astype(jnp.bfloat16),
        "fc1_w": raw["fc1_w"].astype(jnp.bfloat16),
        "fc1_b": raw["fc1_b"].astype(jnp.float32),
        "age_w": _pad_cols(raw["age_w"], a_pad).astype(jnp.bfloat16),
        "age_b": _pad_cols(raw["age_b"], a_pad).astype(jnp.float32),
        "fc2_w": (raw["fc2_w"] * (1.0 / float(h * w))).astype(jnp.bfloat16),
        "fc2_b": raw["fc2_b"].astype(jnp.float32),
        "gen_w": _pad_cols(raw["gen_w"], g_pad).astype(jnp.bfloat16),
        "gen_b": _pad_cols(raw["gen_b"], g_pad).astype(jnp.float32),
    }


def reference_head(x_nhwc, p, num_age, num_gen):
    """Pure-JAX reference (full, uncropped pooling path) using the same
    prepared params — validates the in-kernel crop and pipeline."""
    x = x_nhwc
    N, H, W, Cin = x.shape
    h = jnp.maximum(_bf16_matmul(x.reshape(N * H * W, Cin), p["w1"]), 0.0)
    h = _maxpool2x2(h.reshape(N, H, W, -1))
    _, H2, W2, C1 = h.shape
    h = jnp.maximum(_bf16_matmul(h.reshape(N * H2 * W2, C1), p["w2"]), 0.0)
    h = _maxpool2x2(h.reshape(N, H2, W2, -1))
    _, H4, W4, C2 = h.shape
    if H4 == 1 and W4 == 1:
        flat = h.reshape(N, C2)
    else:
        flat = jnp.transpose(h, (0, 3, 1, 2)).reshape(N, C2 * H4 * W4)
    a = _bf16_matmul(flat, p["fc1_w"]) + p["fc1_b"]
    age = _bf16_matmul(a, p["age_w"]) + p["age_b"]
    g = jnp.sum(x, axis=(1, 2))
    g = _bf16_matmul(g, p["fc2_w"]) + p["fc2_b"]
    gen = _bf16_matmul(g, p["gen_w"]) + p["gen_b"]
    return age[:, :num_age], gen[:, :num_gen]


if __name__ == "__main__":
    # Stand-in dims for the real head (real: Cin=2048, C1=1024, C2=512,
    # fc 512->256->101, fc 2048->512->2, 7x7 map) kept small for a quick run.
    N, H, W = 16, 7, 7
    CIN, C1, C2 = 128, 64, 64
    FC1_OUT, NUM_CLASSES, FC2_OUT = 64, 101, 64

    key = jax.random.PRNGKey(0)
    kx, kp = jax.random.split(key)
    # Backbone feature map constructed directly in NHWC (no wrapper transpose).
    x = jax.random.normal(kx, (N, H, W, CIN), jnp.float32)
    raw = init_params(kp, CIN, C1, C2, FC1_OUT, NUM_CLASSES, FC2_OUT, H, W)
    params = prepare_params(raw, H, W)

    age_pred, gen_pred = age_gender_head(
        x, params, num_age_classes=NUM_CLASSES, num_gender_classes=2, block_n=8)
    jax.block_until_ready((age_pred, gen_pred))
    assert age_pred.shape == (N, NUM_CLASSES) and gen_pred.shape == (N, 2)

    age_ref, gen_ref = reference_head(x, params, NUM_CLASSES, 2)
    assert bool(jnp.all(jnp.isfinite(age_pred))) and bool(jnp.all(jnp.isfinite(gen_pred)))
    assert bool(jnp.allclose(age_pred, age_ref, atol=1e-2, rtol=1e-2))
    assert bool(jnp.allclose(gen_pred, gen_ref, atol=1e-2, rtol=1e-2))
    print("KERNEL_OK")
</pallas_src>

<mosaic_0001>
module attributes {stable_mosaic.version = 11 : i64} {
  func.func @age_gender_head_kernel(%arg0: i32, %arg1: memref<8x7x7x128xf32, #tpu.memory_space<vmem>>, %arg2: memref<128x64xbf16, #tpu.memory_space<vmem>>, %arg3: memref<64x64xbf16, #tpu.memory_space<vmem>>, %arg4: memref<64x64xbf16, #tpu.memory_space<vmem>>, %arg5: memref<1x64xf32, #tpu.memory_space<vmem>>, %arg6: memref<64x128xbf16, #tpu.memory_space<vmem>>, %arg7: memref<1x128xf32, #tpu.memory_space<vmem>>, %arg8: memref<128x64xbf16, #tpu.memory_space<vmem>>, %arg9: memref<1x64xf32, #tpu.memory_space<vmem>>, %arg10: memref<64x128xbf16, #tpu.memory_space<vmem>>, %arg11: memref<1x128xf32, #tpu.memory_space<vmem>>, %arg12: memref<8x128xf32, #tpu.memory_space<vmem>>, %arg13: memref<8x128xf32, #tpu.memory_space<vmem>>) attributes {dimension_semantics = [#tpu.dimension_semantics<parallel>], iteration_bounds = array<i64: 2>, scalar_prefetch = 0 : i64, scratch_operands = 0 : i64, tpu.core_type = #tpu.core_type<tc>, window_params = [{transform_indices = @transform_0, window_bounds = array<i64: 8, 7, 7, 128>}, {pipeline_mode = #tpu.pipeline_mode<synchronous>, transform_indices = @transform_1, window_bounds = array<i64: 128, 64>}, {pipeline_mode = #tpu.pipeline_mode<synchronous>, transform_indices = @transform_2, window_bounds = array<i64: 64, 64>}, {pipeline_mode = #tpu.pipeline_mode<synchronous>, transform_indices = @transform_3, window_bounds = array<i64: 64, 64>}, {pipeline_mode = #tpu.pipeline_mode<synchronous>, transform_indices = @transform_4, window_bounds = array<i64: 1, 64>}, {pipeline_mode = #tpu.pipeline_mode<synchronous>, transform_indices = @transform_5, window_bounds = array<i64: 64, 128>}, {pipeline_mode = #tpu.pipeline_mode<synchronous>, transform_indices = @transform_6, window_bounds = array<i64: 1, 128>}, {pipeline_mode = #tpu.pipeline_mode<synchronous>, transform_indices = @transform_7, window_bounds = array<i64: 128, 64>}, {pipeline_mode = #tpu.pipeline_mode<synchronous>, transform_indices = @transform_8, window_bounds = array<i64: 1, 64>}, {pipeline_mode = #tpu.pipeline_mode<synchronous>, transform_indices = @transform_9, window_bounds = array<i64: 64, 128>}, {pipeline_mode = #tpu.pipeline_mode<synchronous>, transform_indices = @transform_10, window_bounds = array<i64: 1, 128>}, {transform_indices = @transform_11, window_bounds = array<i64: 8, 128>}, {transform_indices = @transform_12, window_bounds = array<i64: 8, 128>}]} {
    %c0 = arith.constant 0 : index
    %c0_0 = arith.constant 0 : index
    %c0_1 = arith.constant 0 : index
    %c0_2 = arith.constant 0 : index
    %0 = vector.load %arg1[%c0, %c0_0, %c0_1, %c0_2] : memref<8x7x7x128xf32, #tpu.memory_space<vmem>>, vector<8x7x7x128xf32>
    %1 = vector.extract_strided_slice %0 {offsets = [0, 0, 0, 0], sizes = [8, 4, 4, 128], strides = [1, 1, 1, 1]} : vector<8x7x7x128xf32> to vector<8x4x4x128xf32>
    %2 = vector.shape_cast %1 : vector<8x4x4x128xf32> to vector<128x128xf32>
    %c0_3 = arith.constant 0 : index
    %c0_4 = arith.constant 0 : index
    %3 = vector.load %arg2[%c0_3, %c0_4] : memref<128x64xbf16, #tpu.memory_space<vmem>>, vector<128x64xbf16>
    %4 = arith.truncf %2 : vector<128x128xf32> to vector<128x128xbf16>
    %cst = arith.constant dense<0.000000e+00> : vector<128x64xf32>
    %5 = tpu.matmul %4, %3, %cst {dimension_numbers = #tpu.dot_dimension_numbers<[1], [0], [0], [1], [0, 0, 1, 1], [], []>} : vector<128x128xbf16>, vector<128x64xbf16>, vector<128x64xf32> -> vector<128x64xf32>
    %cst_5 = arith.constant 0.000000e+00 : f32
    %6 = vector.broadcast %cst_5 : f32 to vector<128x64xf32>
    %7 = arith.maximumf %5, %6 : vector<128x64xf32>
    %8 = vector.shape_cast %7 : vector<128x64xf32> to vector<8x4x4x64xf32>
    %9 = vector.shape_cast %8 : vector<8x4x4x64xf32> to vector<8x4x2x2x64xf32>
    %10 = vector.extract_strided_slice %9 {offsets = [0, 0, 0, 0, 0], sizes = [8, 4, 2, 1, 64], strides = [1, 1, 1, 1, 1]} : vector<8x4x2x2x64xf32> to vector<8x4x2x1x64xf32>
    %11 = vector.shape_cast %10 : vector<8x4x2x1x64xf32> to vector<8x4x2x64xf32>
    %12 = vector.extract_strided_slice %9 {offsets = [0, 0, 0, 1, 0], sizes = [8, 4, 2, 1, 64], strides = [1, 1, 1, 1, 1]} : vector<8x4x2x2x64xf32> to vector<8x4x2x1x64xf32>
    %13 = vector.shape_cast %12 : vector<8x4x2x1x64xf32> to vector<8x4x2x64xf32>
    %14 = arith.maximumf %11, %13 : vector<8x4x2x64xf32>
    %15 = vector.shape_cast %14 : vector<8x4x2x64xf32> to vector<8x2x2x2x64xf32>
    %16 = vector.extract_strided_slice %15 {offsets = [0, 0, 0, 0, 0], sizes = [8, 2, 1, 2, 64], strides = [1, 1, 1, 1, 1]} : vector<8x2x2x2x64xf32> to vector<8x2x1x2x64xf32>
    %17 = vector.shape_cast %16 : vector<8x2x1x2x64xf32> to vector<8x2x2x64xf32>
    %18 = vector.extract_strided_slice %15 {offsets = [0, 0, 1, 0, 0], sizes = [8, 2, 1, 2, 64], strides = [1, 1, 1, 1, 1]} : vector<8x2x2x2x64xf32> to vector<8x2x1x2x64xf32>
    %19 = vector.shape_cast %18 : vector<8x2x1x2x64xf32> to vector<8x2x2x64xf32>
    %20 = arith.maximumf %17, %19 : vector<8x2x2x64xf32>
    %21 = vector.shape_cast %20 : vector<8x2x2x64xf32> to vector<32x64xf32>
    %c0_6 = arith.constant 0 : index
    %c0_7 = arith.constant 0 : index
    %22 = vector.load %arg3[%c0_6, %c0_7] : memref<64x64xbf16, #tpu.memory_space<vmem>>, vector<64x64xbf16>
    %23 = arith.truncf %21 : vector<32x64xf32> to vector<32x64xbf16>
    %cst_8 = arith.constant dense<0.000000e+00> : vector<32x64xf32>
    %24 = tpu.matmul %23, %22, %cst_8 {dimension_numbers = #tpu.dot_dimension_numbers<[1], [0], [0], [1], [0, 0, 1, 1], [], []>} : vector<32x64xbf16>, vector<64x64xbf16>, vector<32x64xf32> -> vector<32x64xf32>
    %cst_9 = arith.constant 0.000000e+00 : f32
    %25 = vector.broadcast %cst_9 : f32 to vector<32x64xf32>
    %26 = arith.maximumf %24, %25 : vector<32x64xf32>
    %27 = vector.shape_cast %26 : vector<32x64xf32> to vector<8x2x2x64xf32>
    %28 = vector.shape_cast %27 : vector<8x2x2x64xf32> to vector<8x2x1x2x64xf32>
    %29 = vector.extract_strided_slice %28 {offsets = [0, 0, 0, 0, 0], sizes = [8, 2, 1, 1, 64], strides = [1, 1, 1, 1, 1]} : vector<8x2x1x2x64xf32> to vector<8x2x1x1x64xf32>
    %30 = vector.shape_cast %29 : vector<8x2x1x1x64xf32> to vector<8x2x1x64xf32>
    %31 = vector.extract_strided_slice %28 {offsets = [0, 0, 0, 1, 0], sizes = [8, 2, 1, 1, 64], strides = [1, 1, 1, 1, 1]} : vector<8x2x1x2x64xf32> to vector<8x2x1x1x64xf32>
    %32 = vector.shape_cast %31 : vector<8x2x1x1x64xf32> to vector<8x2x1x64xf32>
    %33 = arith.maximumf %30, %32 : vector<8x2x1x64xf32>
    %34 = vector.shape_cast %33 : vector<8x2x1x64xf32> to vector<8x1x2x1x64xf32>
    %35 = vector.extract_strided_slice %34 {offsets = [0, 0, 0, 0, 0], sizes = [8, 1, 1, 1, 64], strides = [1, 1, 1, 1, 1]} : vector<8x1x2x1x64xf32> to vector<8x1x1x1x64xf32>
    %36 = vector.shape_cast %35 : vector<8x1x1x1x64xf32> to vector<8x1x1x64xf32>
    %37 = vector.extract_strided_slice %34 {offsets = [0, 0, 1, 0, 0], sizes = [8, 1, 1, 1, 64], strides = [1, 1, 1, 1, 1]} : vector<8x1x2x1x64xf32> to vector<8x1x1x1x64xf32>
    %38 = vector.shape_cast %37 : vector<8x1x1x1x64xf32> to vector<8x1x1x64xf32>
    %39 = arith.maximumf %36, %38 : vector<8x1x1x64xf32>
    %40 = vector.shape_cast %39 : vector<8x1x1x64xf32> to vector<8x64xf32>
    %c0_10 = arith.constant 0 : index
    %c0_11 = arith.constant 0 : index
    %41 = vector.load %arg4[%c0_10, %c0_11] : memref<64x64xbf16, #tpu.memory_space<vmem>>, vector<64x64xbf16>
    %42 = arith.truncf %40 : vector<8x64xf32> to vector<8x64xbf16>
    %cst_12 = arith.constant dense<0.000000e+00> : vector<8x64xf32>
    %43 = tpu.matmul %42, %41, %cst_12 {dimension_numbers = #tpu.dot_dimension_numbers<[1], [0], [0], [1], [0, 0, 1, 1], [], []>} : vector<8x64xbf16>, vector<64x64xbf16>, vector<8x64xf32> -> vector<8x64xf32>
    %c0_13 = arith.constant 0 : index
    %c0_14 = arith.constant 0 : index
    %44 = vector.load %arg5[%c0_13, %c0_14] : memref<1x64xf32, #tpu.memory_space<vmem>>, vector<1x64xf32>
    %45 = vector.broadcast %44 : vector<1x64xf32> to vector<8x64xf32>
    %46 = arith.addf %43, %45 : vector<8x64xf32>
    %c0_15 = arith.constant 0 : index
    %c0_16 = arith.constant 0 : index
    %47 = vector.load %arg6[%c0_15, %c0_16] : memref<64x128xbf16, #tpu.memory_space<vmem>>, vector<64x128xbf16>
    %48 = arith.truncf %46 : vector<8x64xf32> to vector<8x64xbf16>
    %cst_17 = arith.constant dense<0.000000e+00> : vector<8x128xf32>
    %49 = tpu.matmul %48, %47, %cst_17 {dimension_numbers = #tpu.dot_dimension_numbers<[1], [0], [0], [1], [0, 0, 1, 1], [], []>} : vector<8x64xbf16>, vector<64x128xbf16>, vector<8x128xf32> -> vector<8x128xf32>
    %c0_18 = arith.constant 0 : index
    %c0_19 = arith.constant 0 : index
    %50 = vector.load %arg7[%c0_18, %c0_19] : memref<1x128xf32, #tpu.memory_space<vmem>>, vector<1x128xf32>
    %51 = vector.broadcast %50 : vector<1x128xf32> to vector<8x128xf32>
    %52 = arith.addf %49, %51 : vector<8x128xf32>
    %c0_20 = arith.constant 0 : index
    %c0_21 = arith.constant 0 : index
    %53 = vector.load %arg12[%c0_20, %c0_21] : memref<8x128xf32, #tpu.memory_space<vmem>>, vector<8x128xf32>
    tpu.vector_store %arg12[%c0_20, %c0_21], %52 {strides = array<i32>} : memref<8x128xf32, #tpu.memory_space<vmem>>, vector<8x128xf32>,
    %cst_22 = arith.constant dense<0.000000e+00> : vector<8x128xf32>
    %54 = vector.multi_reduction <add>, %0, %cst_22 [1, 2] : vector<8x7x7x128xf32> to vector<8x128xf32>
    %c0_23 = arith.constant 0 : index
    %c0_24 = arith.constant 0 : index
    %55 = vector.load %arg8[%c0_23, %c0_24] : memref<128x64xbf16, #tpu.memory_space<vmem>>, vector<128x64xbf16>
    %56 = arith.truncf %54 : vector<8x128xf32> to vector<8x128xbf16>
    %cst_25 = arith.constant dense<0.000000e+00> : vector<8x64xf32>
    %57 = tpu.matmul %56, %55, %cst_25 {dimension_numbers = #tpu.dot_dimension_numbers<[1], [0], [0], [1], [0, 0, 1, 1], [], []>} : vector<8x128xbf16>, vector<128x64xbf16>, vector<8x64xf32> -> vector<8x64xf32>
    %c0_26 = arith.constant 0 : index
    %c0_27 = arith.constant 0 : index
    %58 = vector.load %arg9[%c0_26, %c0_27] : memref<1x64xf32, #tpu.memory_space<vmem>>, vector<1x64xf32>
    %59 = vector.broadcast %58 : vector<1x64xf32> to vector<8x64xf32>
    %60 = arith.addf %57, %59 : vector<8x64xf32>
    %c0_28 = arith.constant 0 : index
    %c0_29 = arith.constant 0 : index
    %61 = vector.load %arg10[%c0_28, %c0_29] : memref<64x128xbf16, #tpu.memory_space<vmem>>, vector<64x128xbf16>
    %62 = arith.truncf %60 : vector<8x64xf32> to vector<8x64xbf16>
    %cst_30 = arith.constant dense<0.000000e+00> : vector<8x128xf32>
    %63 = tpu.matmul %62, %61, %cst_30 {dimension_numbers = #tpu.dot_dimension_numbers<[1], [0], [0], [1], [0, 0, 1, 1], [], []>} : vector<8x64xbf16>, vector<64x128xbf16>, vector<8x128xf32> -> vector<8x128xf32>
    %c0_31 = arith.constant 0 : index
    %c0_32 = arith.constant 0 : index
    %64 = vector.load %arg11[%c0_31, %c0_32] : memref<1x128xf32, #tpu.memory_space<vmem>>, vector<1x128xf32>
    %65 = vector.broadcast %64 : vector<1x128xf32> to vector<8x128xf32>
    %66 = arith.addf %63, %65 : vector<8x128xf32>
    %c0_33 = arith.constant 0 : index
    %c0_34 = arith.constant 0 : index
    %67 = vector.load %arg13[%c0_33, %c0_34] : memref<8x128xf32, #tpu.memory_space<vmem>>, vector<8x128xf32>
    tpu.vector_store %arg13[%c0_33, %c0_34], %66 {strides = array<i32>} : memref<8x128xf32, #tpu.memory_space<vmem>>, vector<8x128xf32>,
    return
  }
  func.func @transform_0(%arg0: i32) -> (i32, i32, i32, i32) {
    %c0_i32 = arith.constant 0 : i32
    %c0_i32_0 = arith.constant 0 : i32
    %c0_i32_1 = arith.constant 0 : i32
    %c0_i32_2 = arith.constant 0 : i32
    return %arg0, %c0_i32, %c0_i32_0, %c0_i32_1 : i32, i32, i32, i32
  }
  func.func @transform_1(%arg0: i32) -> (i32, i32) {
    %c0_i32 = arith.constant 0 : i32
    %c0_i32_0 = arith.constant 0 : i32
    %c0_i32_1 = arith.constant 0 : i32
    return %c0_i32, %c0_i32_0 : i32, i32
  }
  func.func @transform_2(%arg0: i32) -> (i32, i32) {
    %c0_i32 = arith.constant 0 : i32
    %c0_i32_0 = arith.constant 0 : i32
    %c0_i32_1 = arith.constant 0 : i32
    return %c0_i32, %c0_i32_0 : i32, i32
  }
  func.func @transform_3(%arg0: i32) -> (i32, i32) {
    %c0_i32 = arith.constant 0 : i32
    %c0_i32_0 = arith.constant 0 : i32
    %c0_i32_1 = arith.constant 0 : i32
    return %c0_i32, %c0_i32_0 : i32, i32
  }
  func.func @transform_4(%arg0: i32) -> (i32, i32) {
    %c0_i32 = arith.constant 0 : i32
    %c0_i32_0 = arith.constant 0 : i32
    %c0_i32_1 = arith.constant 0 : i32
    return %c0_i32, %c0_i32_0 : i32, i32
  }
  func.func @transform_5(%arg0: i32) -> (i32, i32) {
    %c0_i32 = arith.constant 0 : i32
    %c0_i32_0 = arith.constant 0 : i32
    %c0_i32_1 = arith.constant 0 : i32
    return %c0_i32, %c0_i32_0 : i32, i32
  }
  func.func @transform_6(%arg0: i32) -> (i32, i32) {
    %c0_i32 = arith.constant 0 : i32
    %c0_i32_0 = arith.constant 0 : i32
    %c0_i32_1 = arith.constant 0 : i32
    return %c0_i32, %c0_i32_0 : i32, i32
  }
  func.func @transform_7(%arg0: i32) -> (i32, i32) {
    %c0_i32 = arith.constant 0 : i32
    %c0_i32_0 = arith.constant 0 : i32
    %c0_i32_1 = arith.constant 0 : i32
    return %c0_i32, %c0_i32_0 : i32, i32
  }
  func.func @transform_8(%arg0: i32) -> (i32, i32) {
    %c0_i32 = arith.constant 0 : i32
    %c0_i32_0 = arith.constant 0 : i32
    %c0_i32_1 = arith.constant 0 : i32
    return %c0_i32, %c0_i32_0 : i32, i32
  }
  func.func @transform_9(%arg0: i32) -> (i32, i32) {
    %c0_i32 = arith.constant 0 : i32
    %c0_i32_0 = arith.constant 0 : i32
    %c0_i32_1 = arith.constant 0 : i32
    return %c0_i32, %c0_i32_0 : i32, i32
  }
  func.func @transform_10(%arg0: i32) -> (i32, i32) {
    %c0_i32 = arith.constant 0 : i32
    %c0_i32_0 = arith.constant 0 : i32
    %c0_i32_1 = arith.constant 0 : i32
    return %c0_i32, %c0_i32_0 : i32, i32
  }
  func.func @transform_11(%arg0: i32) -> (i32, i32) {
    %c0_i32 = arith.constant 0 : i32
    %c0_i32_0 = arith.constant 0 : i32
    return %arg0, %c0_i32 : i32, i32
  }
  func.func @transform_12(%arg0: i32) -> (i32, i32) {
    %c0_i32 = arith.constant 0 : i32
    %c0_i32_0 = arith.constant 0 : i32
    return %arg0, %c0_i32 : i32, i32
  }
}

</mosaic_0001>

<llo_original>
// kernel: tpu_custom_call.1
$region0: #{tpu_custom_call.1}
  #allocation0 [shape = 'u32[]', space=smem, size = 0x4, offset = 0x4, fixed_abs, tag = 'smem constant byte address 0x4 - core index']
  #allocation1 [shape = 'u32[144,128]{1,0:T(1,128)}', space=vmem, size = 0x12000, scoped, tag = 'internal scratch']
  %s0 = inlined_call_operand.vmem [shape: f32[16,7,7,128], index: 0, kind: input, shape index: {}]
  %s1 = inlined_call_operand.vmem [shape: bf16[128,64], index: 1, kind: input, shape index: {}]
  %s2 = inlined_call_operand.vmem [shape: bf16[64,64], index: 2, kind: input, shape index: {}]
  %s3 = inlined_call_operand.vmem [shape: bf16[64,64], index: 3, kind: input, shape index: {}]
  %s4 = inlined_call_operand.vmem [shape: f32[1,64], index: 4, kind: input, shape index: {}]
  %s5 = inlined_call_operand.vmem [shape: bf16[64,128], index: 5, kind: input, shape index: {}]
  %s6 = inlined_call_operand.vmem [shape: f32[1,128], index: 6, kind: input, shape index: {}]
  %s7 = inlined_call_operand.vmem [shape: bf16[128,64], index: 7, kind: input, shape index: {}]
  %s8 = inlined_call_operand.vmem [shape: f32[1,64], index: 8, kind: input, shape index: {}]
  %s9 = inlined_call_operand.vmem [shape: bf16[64,128], index: 9, kind: input, shape index: {}]
  %s10 = inlined_call_operand.vmem [shape: f32[1,128], index: 10, kind: input, shape index: {}]
  %s11 = inlined_call_operand.hbm [shape: f32[16,128], index: 11, kind: output, shape index: {0}]
  %s12 = inlined_call_operand.hbm [shape: f32[16,128], index: 12, kind: output, shape index: {1}]
  %13 = xla_tuple %s11, %s12
  %s14 = sld [smem:[#allocation0]]
  $region85: #{tpu_custom_call.1} parent=0
    _
  %s16 = ssub.s32 1, %s14
  %s17 = scalar_select 0, %s16, %s14
  $region1: #{tpu_custom_call.1} parent=0
    #allocation2 [shape = 'u8[8192]{0}', space=vmem, size = 0x2000, scoped, tag = 'output window, operand 0']
    #allocation3 [shape = 's32[2]{0}', space=sflag, size = 0x8, scoped, tag = 'scoped memory for tpu_custom_call.1']
    #allocation4 [shape = 'u8[8192]{0}', space=vmem, size = 0x2000, scoped, tag = 'output window, operand 1']
    #allocation5 [shape = 's32[2]{0}', space=sflag, size = 0x8, scoped, tag = 'scoped memory for tpu_custom_call.1']
    %18 = vsyncpa [#allocation3], 0
    %s19 = scalar_lea.sflag [#allocation3], 1
    %20 = vsyncpa %s19, 0
    %21 = vsyncpa [#allocation5], 0
    %s22 = scalar_lea.sflag [#allocation5], 1
    %23 = vsyncpa %s22, 0
    loop: start=0, step=1, limit=4
    $region2: #{tpu_custom_call.1} parent=1 // loop_pre_header
      _
    $region3: #{tpu_custom_call.1} parent=1 // loop_header
      %s25 = sphi 0, %s29
      %p26 = scmp.ge.s32.totalorder %s25, 4
      %s35 = sphi 0, %s37
      %s38 = sphi 0, %s35
      %s39 = sphi 0, %s38
      %s55 = sphi 0, %s39
      %s59 = sphi 0, %s59
      %s61 = sphi 0, %s59
      %s62 = sphi 0, %s61
      %s76 = sphi 0, %s62
      %s80 = sphi 0, %s80
      %s82 = sphi 0, %s80
      %s83 = sphi 0, %s82
      %s97 = sphi 0, %s83
      %s101 = sphi 0, %s101
      %s103 = sphi 0, %s101
      %s104 = sphi 0, %s103
      %s118 = sphi 0, %s104
      %s122 = sphi 0, %s122
      %s124 = sphi 0, %s122
      %s125 = sphi 0, %s124
      %s139 = sphi 0, %s125
      %s143 = sphi 0, %s143
      %s145 = sphi 0, %s143
      %s146 = sphi 0, %s145
      %s160 = sphi 0, %s146
      %s164 = sphi 0, %s164
      %s166 = sphi 0, %s164
      %s167 = sphi 0, %s166
      %s181 = sphi 0, %s167
      %s185 = sphi 0, %s185
      %s187 = sphi 0, %s185
      %s188 = sphi 0, %s187
      %s202 = sphi 0, %s188
      %s206 = sphi 0, %s206
      %s208 = sphi 0, %s206
      %s209 = sphi 0, %s208
      %s223 = sphi 0, %s209
      %s227 = sphi 0, %s227
      %s229 = sphi 0, %s227
      %s230 = sphi 0, %s229
      %s244 = sphi 0, %s230
      %s248 = sphi 0, %s248
      %s250 = sphi 0, %s248
      %s251 = sphi 0, %s250
      %s265 = sphi 0, %s251
      %s271 = sphi 0, %s273
      %s274 = sphi 0, %s271
      %s275 = sphi 0, %s274
      %s291 = sphi 0, %s275
      %s297 = sphi 0, %s299
      %s300 = sphi 0, %s297
      %s301 = sphi 0, %s300
      %s317 = sphi 0, %s301
    $region4: #{tpu_custom_call.1} parent=1 // loop_header_branch
      %28 = sbr.rel (%p26) target = $region8
    $region5: #{tpu_custom_call.1} parent=1 // loop_body
      %s30 = ssub.s32 %s25, 1
      %s31 = ssub.s32 %s25, 2
      %s32 = sadd.s32 %s25, 1
      %s33 = ssub.s32 %s25, %s32
      %p34 = scmp.eq.s32.totalorder %s33, 0
      %s36 = sadd.s32 %s35, 1
      %s37 = scalar_select %p34, %s35, %s36
      %p40 = pneg %p34
      %p41 = scmp.eq.s32.totalorder %s25, 1
      %p42 = por %p40, %p41
      %p43 = scmp.ne.s32.totalorder %s35, %s38
      %p44 = scmp.eq.s32.totalorder %s25, 0
      %p45 = por %p43, %p44
      %p46 = scmp.ne.s32.totalorder %s35, %s38
      %p47 = scmp.eq.s32.totalorder %s30, 1
      %p48 = por %p46, %p47
      %p49 = scmp.ne.s32.totalorder %s38, %s39
      %p50 = scmp.eq.s32.totalorder %s30, 0
      %p51 = por %p49, %p50
      %p52 = scmp.ne.s32.totalorder %s38, %s39
      %p53 = scmp.eq.s32.totalorder %s31, 1
      %p54 = por %p52, %p53
      %p56 = scmp.ne.s32.totalorder %s39, %s55
      %p57 = scmp.eq.s32.totalorder %s31, 0
      %p58 = por %p56, %p57
      %s60 = sadd.s32 %s59, 1
      %p63 = scmp.eq.s32.totalorder %s25, 1
      %p64 = scmp.ne.s32.totalorder %s59, %s61
      %p65 = scmp.eq.s32.totalorder %s25, 0
      %p66 = por %p64, %p65
      %p67 = scmp.ne.s32.totalorder %s59, %s61
      %p68 = scmp.eq.s32.totalorder %s30, 1
      %p69 = por %p67, %p68
      %p70 = scmp.ne.s32.totalorder %s61, %s62
      %p71 = scmp.eq.s32.totalorder %s30, 0
      %p72 = por %p70, %p71
      %p73 = scmp.ne.s32.totalorder %s61, %s62
      %p74 = scmp.eq.s32.totalorder %s31, 1
      %p75 = por %p73, %p74
      %p77 = scmp.ne.s32.totalorder %s62, %s76
      %p78 = scmp.eq.s32.totalorder %s31, 0
      %p79 = por %p77, %p78
      %s81 = sadd.s32 %s80, 1
      %p84 = scmp.eq.s32.totalorder %s25, 1
      %p85 = scmp.ne.s32.totalorder %s80, %s82
      %p86 = scmp.eq.s32.totalorder %s25, 0
      %p87 = por %p85, %p86
      %p88 = scmp.ne.s32.totalorder %s80, %s82
      %p89 = scmp.eq.s32.totalorder %s30, 1
      %p90 = por %p88, %p89
      %p91 = scmp.ne.s32.totalorder %s82, %s83
      %p92 = scmp.eq.s32.totalorder %s30, 0
      %p93 = por %p91, %p92
      %p94 = scmp.ne.s32.totalorder %s82, %s83
      %p95 = scmp.eq.s32.totalorder %s31, 1
      %p96 = por %p94, %p95
      %p98 = scmp.ne.s32.totalorder %s83, %s97
      %p99 = scmp.eq.s32.totalorder %s31, 0
      %p100 = por %p98, %p99
      %s102 = sadd.s32 %s101, 1
      %p105 = scmp.eq.s32.totalorder %s25, 1
      %p106 = scmp.ne.s32.totalorder %s101, %s103
      %p107 = scmp.eq.s32.totalorder %s25, 0
      %p108 = por %p106, %p107
      %p109 = scmp.ne.s32.totalorder %s101, %s103
      %p110 = scmp.eq.s32.totalorder %s30, 1
      %p111 = por %p109, %p110
      %p112 = scmp.ne.s32.totalorder %s103, %s104
      %p113 = scmp.eq.s32.totalorder %s30, 0
      %p114 = por %p112, %p113
      %p115 = scmp.ne.s32.totalorder %s103, %s104
      %p116 = scmp.eq.s32.totalorder %s31, 1
      %p117 = por %p115, %p116
      %p119 = scmp.ne.s32.totalorder %s104, %s118
      %p120 = scmp.eq.s32.totalorder %s31, 0
      %p121 = por %p119, %p120
      %s123 = sadd.s32 %s122, 1
      %p126 = scmp.eq.s32.totalorder %s25, 1
      %p127 = scmp.ne.s32.totalorder %s122, %s124
      %p128 = scmp.eq.s32.totalorder %s25, 0
      %p129 = por %p127, %p128
      %p130 = scmp.ne.s32.totalorder %s122, %s124
      %p131 = scmp.eq.s32.totalorder %s30, 1
      %p132 = por %p130, %p131
      %p133 = scmp.ne.s32.totalorder %s124, %s125
      %p134 = scmp.eq.s32.totalorder %s30, 0
      %p135 = por %p133, %p134
      %p136 = scmp.ne.s32.totalorder %s124, %s125
      %p137 = scmp.eq.s32.totalorder %s31, 1
      %p138 = por %p136, %p137
      %p140 = scmp.ne.s32.totalorder %s125, %s139
      %p141 = scmp.eq.s32.totalorder %s31, 0
      %p142 = por %p140, %p141
      %s144 = sadd.s32 %s143, 1
      %p147 = scmp.eq.s32.totalorder %s25, 1
      %p148 = scmp.ne.s32.totalorder %s143, %s145
      %p149 = scmp.eq.s32.totalorder %s25, 0
      %p150 = por %p148, %p149
      %p151 = scmp.ne.s32.totalorder %s143, %s145
      %p152 = scmp.eq.s32.totalorder %s30, 1
      %p153 = por %p151, %p152
      %p154 = scmp.ne.s32.totalorder %s145, %s146
      %p155 = scmp.eq.s32.totalorder %s30, 0
      %p156 = por %p154, %p155
      %p157 = scmp.ne.s32.totalorder %s145, %s146
      %p158 = scmp.eq.s32.totalorder %s31, 1
      %p159 = por %p157, %p158
      %p161 = scmp.ne.s32.totalorder %s146, %s160
      %p162 = scmp.eq.s32.totalorder %s31, 0
      %p163 = por %p161, %p162
      %s165 = sadd.s32 %s164, 1
      %p168 = scmp.eq.s32.totalorder %s25, 1
      %p169 = scmp.ne.s32.totalorder %s164, %s166
      %p170 = scmp.eq.s32.totalorder %s25, 0
      %p171 = por %p169, %p170
      %p172 = scmp.ne.s32.totalorder %s164, %s166
      %p173 = scmp.eq.s32.totalorder %s30, 1
      %p174 = por %p172, %p173
      %p175 = scmp.ne.s32.totalorder %s166, %s167
      %p176 = scmp.eq.s32.totalorder %s30, 0
      %p177 = por %p175, %p176
      %p178 = scmp.ne.s32.totalorder %s166, %s167
      %p179 = scmp.eq.s32.totalorder %s31, 1
      %p180 = por %p178, %p179
      %p182 = scmp.ne.s32.totalorder %s167, %s181
      %p183 = scmp.eq.s32.totalorder %s31, 0
      %p184 = por %p182, %p183
      %s186 = sadd.s32 %s185, 1
      %p189 = scmp.eq.s32.totalorder %s25, 1
      %p190 = scmp.ne.s32.totalorder %s185, %s187
      %p191 = scmp.eq.s32.totalorder %s25, 0
      %p192 = por %p190, %p191
      %p193 = scmp.ne.s32.totalorder %s185, %s187
      %p194 = scmp.eq.s32.totalorder %s30, 1
      %p195 = por %p193, %p194
      %p196 = scmp.ne.s32.totalorder %s187, %s188
      %p197 = scmp.eq.s32.totalorder %s30, 0
      %p198 = por %p196, %p197
      %p199 = scmp.ne.s32.totalorder %s187, %s188
      %p200 = scmp.eq.s32.totalorder %s31, 1
      %p201 = por %p199, %p200
      %p203 = scmp.ne.s32.totalorder %s188, %s202
      %p204 = scmp.eq.s32.totalorder %s31, 0
      %p205 = por %p203, %p204
      %s207 = sadd.s32 %s206, 1
      %p210 = scmp.eq.s32.totalorder %s25, 1
      %p211 = scmp.ne.s32.totalorder %s206, %s208
      %p212 = scmp.eq.s32.totalorder %s25, 0
      %p213 = por %p211, %p212
      %p214 = scmp.ne.s32.totalorder %s206, %s208
      %p215 = scmp.eq.s32.totalorder %s30, 1
      %p216 = por %p214, %p215
      %p217 = scmp.ne.s32.totalorder %s208, %s209
      %p218 = scmp.eq.s32.totalorder %s30, 0
      %p219 = por %p217, %p218
      %p220 = scmp.ne.s32.totalorder %s208, %s209
      %p221 = scmp.eq.s32.totalorder %s31, 1
      %p222 = por %p220, %p221
      %p224 = scmp.ne.s32.totalorder %s209, %s223
      %p225 = scmp.eq.s32.totalorder %s31, 0
      %p226 = por %p224, %p225
      %s228 = sadd.s32 %s227, 1
      %p231 = scmp.eq.s32.totalorder %s25, 1
      %p232 = scmp.ne.s32.totalorder %s227, %s229
      %p233 = scmp.eq.s32.totalorder %s25, 0
      %p234 = por %p232, %p233
      %p235 = scmp.ne.s32.totalorder %s227, %s229
      %p236 = scmp.eq.s32.totalorder %s30, 1
      %p237 = por %p235, %p236
      %p238 = scmp.ne.s32.totalorder %s229, %s230
      %p239 = scmp.eq.s32.totalorder %s30, 0
      %p240 = por %p238, %p239
      %p241 = scmp.ne.s32.totalorder %s229, %s230
      %p242 = scmp.eq.s32.totalorder %s31, 1
      %p243 = por %p241, %p242
      %p245 = scmp.ne.s32.totalorder %s230, %s244
      %p246 = scmp.eq.s32.totalorder %s31, 0
      %p247 = por %p245, %p246
      %s249 = sadd.s32 %s248, 1
      %p252 = scmp.eq.s32.totalorder %s25, 1
      %p253 = scmp.ne.s32.totalorder %s248, %s250
      %p254 = scmp.eq.s32.totalorder %s25, 0
      %p255 = por %p253, %p254
      %p256 = scmp.ne.s32.totalorder %s248, %s250
      %p257 = scmp.eq.s32.totalorder %s30, 1
      %p258 = por %p256, %p257
      %p259 = scmp.ne.s32.totalorder %s250, %s251
      %p260 = scmp.eq.s32.totalorder %s30, 0
      %p261 = por %p259, %p260
      %p262 = scmp.ne.s32.totalorder %s250, %s251
      %p263 = scmp.eq.s32.totalorder %s31, 1
      %p264 = por %p262, %p263
      %p266 = scmp.ne.s32.totalorder %s251, %s265
      %p267 = scmp.eq.s32.totalorder %s31, 0
      %p268 = por %p266, %p267
      %s269 = ssub.s32 %s25, %s32
      %p270 = scmp.eq.s32.totalorder %s269, 0
      %s272 = sadd.s32 %s271, 1
      %s273 = scalar_select %p270, %s271, %s272
      %p276 = pneg %p270
      %p277 = scmp.eq.s32.totalorder %s25, 1
      %p278 = por %p276, %p277
      %p279 = scmp.ne.s32.totalorder %s271, %s274
      %p280 = scmp.eq.s32.totalorder %s25, 0
      %p281 = por %p279, %p280
      %p282 = scmp.ne.s32.totalorder %s271, %s274
      %p283 = scmp.eq.s32.totalorder %s30, 1
      %p284 = por %p282, %p283
      %p285 = scmp.ne.s32.totalorder %s274, %s275
      %p286 = scmp.eq.s32.totalorder %s30, 0
      %p287 = por %p285, %p286
      %p288 = scmp.ne.s32.totalorder %s274, %s275
      %p289 = scmp.eq.s32.totalorder %s31, 1
      %p290 = por %p288, %p289
      %p292 = scmp.ne.s32.totalorder %s275, %s291
      %p293 = scmp.eq.s32.totalorder %s31, 0
      %p294 = por %p292, %p293
      %s295 = ssub.s32 %s25, %s32
      %p296 = scmp.eq.s32.totalorder %s295, 0
      %s298 = sadd.s32 %s297, 1
      %s299 = scalar_select %p296, %s297, %s298
      %p302 = pneg %p296
      %p303 = scmp.eq.s32.totalorder %s25, 1
      %p304 = por %p302, %p303
      %p305 = scmp.ne.s32.totalorder %s297, %s300
      %p306 = scmp.eq.s32.totalorder %s25, 0
      %p307 = por %p305, %p306
      %p308 = scmp.ne.s32.totalorder %s297, %s300
      %p309 = scmp.eq.s32.totalorder %s30, 1
      %p310 = por %p308, %p309
      %p311 = scmp.ne.s32.totalorder %s300, %s301
      %p312 = scmp.eq.s32.totalorder %s30, 0
      %p313 = por %p311, %p312
      %p314 = scmp.ne.s32.totalorder %s300, %s301
      %p315 = scmp.eq.s32.totalorder %s31, 1
      %p316 = por %p314, %p315
      %p318 = scmp.ne.s32.totalorder %s301, %s317
      %p319 = scmp.eq.s32.totalorder %s31, 0
      %p320 = por %p318, %p319
      %p321 = scmp.le.s32.totalorder 1, %s25
      %p322 = scmp.lt.s32.totalorder %s25, 3
      %p323 = pnand %p321, %p322
      %p324 = pneg %p323
      // Predicated region
      $region9: #{tpu_custom_call.1} parent=5 // pred_check
        _
      $region10: #{tpu_custom_call.1} parent=5 // pred_check_branch
        %326 = sbr.rel (%p323) target = $region12
      $region11: #{tpu_custom_call.1} parent=5 // pred_region
        %s327 = ssub.s32 %s25, 1
        // Predicated region
        $region13: #{tpu_custom_call.1} parent=11 // pred_check
          %p328 = pneg %p72
        $region14: #{tpu_custom_call.1} parent=11 // pred_check_branch
          %330 = sbr.rel (%p328) target = $region16
        $region15: #{tpu_custom_call.1} parent=11 // pred_region
          _
        $region16: #{tpu_custom_call.1} parent=11 // pred_fallthru
          _
        // Predicated region
        $region17: #{tpu_custom_call.1} parent=11 // pred_check
          %p331 = pneg %p93
        $region18: #{tpu_custom_call.1} parent=11 // pred_check_branch
          %333 = sbr.rel (%p331) target = $region20
        $region19: #{tpu_custom_call.1} parent=11 // pred_region
          _
        $region20: #{tpu_custom_call.1} parent=11 // pred_fallthru
          _
        // Predicated region
        $region21: #{tpu_custom_call.1} parent=11 // pred_check
          %p334 = pneg %p114
        $region22: #{tpu_custom_call.1} parent=11 // pred_check_branch
          %336 = sbr.rel (%p334) target = $region24
        $region23: #{tpu_custom_call.1} parent=11 // pred_region
          _
        $region24: #{tpu_custom_call.1} parent=11 // pred_fallthru
          _
        // Predicated region
        $region25: #{tpu_custom_call.1} parent=11 // pred_check
          %p337 = pneg %p135
        $region26: #{tpu_custom_call.1} parent=11 // pred_check_branch
          %339 = sbr.rel (%p337) target = $region28
        $region27: #{tpu_custom_call.1} parent=11 // pred_region
          _
        $region28: #{tpu_custom_call.1} parent=11 // pred_fallthru
          _
        // Predicated region
        $region29: #{tpu_custom_call.1} parent=11 // pred_check
          %p340 = pneg %p156
        $region30: #{tpu_custom_call.1} parent=11 // pred_check_branch
          %342 = sbr.rel (%p340) target = $region32
        $region31: #{tpu_custom_call.1} parent=11 // pred_region
          _
        $region32: #{tpu_custom_call.1} parent=11 // pred_fallthru
          _
        // Predicated region
        $region33: #{tpu_custom_call.1} parent=11 // pred_check
          %p343 = pneg %p177
        $region34: #{tpu_custom_call.1} parent=11 // pred_check_branch
          %345 = sbr.rel (%p343) target = $region36
        $region35: #{tpu_custom_call.1} parent=11 // pred_region
          _
        $region36: #{tpu_custom_call.1} parent=11 // pred_fallthru
          _
        // Predicated region
        $region37: #{tpu_custom_call.1} parent=11 // pred_check
          %p346 = pneg %p198
        $region38: #{tpu_custom_call.1} parent=11 // pred_check_branch
          %348 = sbr.rel (%p346) target = $region40
        $region39: #{tpu_custom_call.1} parent=11 // pred_region
          _
        $region40: #{tpu_custom_call.1} parent=11 // pred_fallthru
          _
        // Predicated region
        $region41: #{tpu_custom_call.1} parent=11 // pred_check
          %p349 = pneg %p219
        $region42: #{tpu_custom_call.1} parent=11 // pred_check_branch
          %351 = sbr.rel (%p349) target = $region44
        $region43: #{tpu_custom_call.1} parent=11 // pred_region
          _
        $region44: #{tpu_custom_call.1} parent=11 // pred_fallthru
          _
        // Predicated region
        $region45: #{tpu_custom_call.1} parent=11 // pred_check
          %p352 = pneg %p240
        $region46: #{tpu_custom_call.1} parent=11 // pred_check_branch
          %354 = sbr.rel (%p352) target = $region48
        $region47: #{tpu_custom_call.1} parent=11 // pred_region
          _
        $region48: #{tpu_custom_call.1} parent=11 // pred_fallthru
          _
        // Predicated region
        $region49: #{tpu_custom_call.1} parent=11 // pred_check
          %p355 = pneg %p261
        $region50: #{tpu_custom_call.1} parent=11 // pred_check_branch
          %357 = sbr.rel (%p355) target = $region52
        $region51: #{tpu_custom_call.1} parent=11 // pred_region
          _
        $region52: #{tpu_custom_call.1} parent=11 // pred_fallthru
          _
      $region12: #{tpu_custom_call.1} parent=5 // pred_fallthru
        _
      %p358 = scmp.lt.s32.totalorder %s25, 2
      // Predicated region
      $region53: #{tpu_custom_call.1} parent=5 // pred_check
        %p359 = pneg %p358
      $region54: #{tpu_custom_call.1} parent=5 // pred_check_branch
        %361 = sbr.rel (%p359) target = $region56
      $region55: #{tpu_custom_call.1} parent=5 // pred_region
        // Predicated region
        $region57: #{tpu_custom_call.1} parent=55 // pred_check
          %p362 = pneg %p45
        $region58: #{tpu_custom_call.1} parent=55 // pred_check_branch
          %364 = sbr.rel (%p362) target = $region60
        $region59: #{tpu_custom_call.1} parent=55 // pred_region
          %s365 = smul.u32 8, %s25
          %p366 = scmp.lt.s32.totalorder %s365, 15
          %s367 = scalar_select %p366, %s365, 15
          %s368 = smul.addr %s367, 7
          %s369 = smul.addr %s368, 8
          %s370 = scalar_lea.vmem %s0, %s369
          %s371 = smul.u32 8, %s25
        $region60: #{tpu_custom_call.1} parent=55 // pred_fallthru
          _
      $region56: #{tpu_custom_call.1} parent=5 // pred_fallthru
        _
      %p372 = scmp.le.s32.totalorder 1, %s25
      %p373 = scmp.lt.s32.totalorder %s25, 3
      %p374 = pnand %p372, %p373
      %p375 = pneg %p374
      // Predicated region
      $region61: #{tpu_custom_call.1} parent=5 // pred_check
        _
      $region62: #{tpu_custom_call.1} parent=5 // pred_check_branch
        %377 = sbr.rel (%p374) target = $region64
      $region63: #{tpu_custom_call.1} parent=5 // pred_region
        %s378 = ssub.s32 %s25, 1
        %s379 = smul.u32 8, %s30
        %p380 = scmp.lt.s32.totalorder %s379, 15
        %s381 = scalar_select %p380, %s379, 15
        %s382 = smul.addr %s381, 7
        %s383 = smul.addr %s382, 8
        %s384 = scalar_lea.vmem %s0, %s383
        %p385 = pneg %p51
        %p386 = pneg %p48
        %p387 = pneg %p72
        %p388 = pneg %p69
        %p389 = pneg %p93
        %p390 = pneg %p90
        %p391 = pneg %p114
        %p392 = pneg %p111
        %p393 = pneg %p135
        %p394 = pneg %p132
        %p395 = pneg %p156
        %p396 = pneg %p153
        %p397 = pneg %p177
        %p398 = pneg %p174
        %p399 = pneg %p198
        %p400 = pneg %p195
        %p401 = pneg %p219
        %p402 = pneg %p216
        %p403 = pneg %p240
        %p404 = pneg %p237
        %p405 = pneg %p261
        %p406 = pneg %p258
        %p407 = pneg %p287
        %p408 = pneg %p284
        %s409 = sand.u32 %s274, 1
        %s410 = scalar_lea.sflag [#allocation3], %s409
        %s411 = sand.u32 %s274, 1
        %s412 = smul.addr %s411, 8
        %s413 = scalar_lea.vmem [#allocation2], %s412
        %p414 = pneg %p313
        %p415 = pneg %p310
        %s416 = sand.u32 %s300, 1
        %s417 = scalar_lea.sflag [#allocation5], %s416
        %s418 = sand.u32 %s300, 1
        %s419 = smul.addr %s418, 8
        %s420 = scalar_lea.vmem [#allocation4], %s419
        %s421 = smul.u32 8, %s30
        %p422 = scmp.lt.s32.totalorder %s421, 15
        %s423 = scalar_select %p422, %s421, 15
        %s424 = smul.addr %s423, 7
        %s425 = smul.addr %s424, 8
        %s426 = scalar_lea.vmem %s0, %s425
        %s427 = smul.u32 8, %s30
        %v429 = vld [vmem:[%s426] sm:$0x7f]
        %v430 = vld [vmem:[%s426 + $0x8] sm:$0x7f]
        %v431 = vld [vmem:[%s426 + $0x10] sm:$0x7f]
        %v432 = vld [vmem:[%s426 + $0x18] sm:$0x7f]
        %v433 = vld [vmem:[%s426 + $0x20] sm:$0x7f]
        %v434 = vld [vmem:[%s426 + $0x28] sm:$0x7f]
        %v435 = vld [vmem:[%s426 + $0x30] sm:$0x7f]
        %v436 = vld [vmem:[%s426 + $0x38] sm:$0x7f]
        %v437 = vld [vmem:[%s426 + $0x40] sm:$0x7f]
        %v438 = vld [vmem:[%s426 + $0x48] sm:$0x7f]
        %v439 = vld [vmem:[%s426 + $0x50] sm:$0x7f]
        %v440 = vld [vmem:[%s426 + $0x58] sm:$0x7f]
        %v441 = vld [vmem:[%s426 + $0x60] sm:$0x7f]
        %v442 = vld [vmem:[%s426 + $0x68] sm:$0x7f]
        %v443 = vld [vmem:[%s426 + $0x70] sm:$0x7f]
        %v444 = vld [vmem:[%s426 + $0x78] sm:$0x7f]
        %v445 = vld [vmem:[%s426 + $0x80] sm:$0x7f]
        %v446 = vld [vmem:[%s426 + $0x88] sm:$0x7f]
        %v447 = vld [vmem:[%s426 + $0x90] sm:$0x7f]
        %v448 = vld [vmem:[%s426 + $0x98] sm:$0x7f]
        %v449 = vld [vmem:[%s426 + $0xa0] sm:$0x7f]
        %v450 = vld [vmem:[%s426 + $0xa8] sm:$0x7f]
        %v451 = vld [vmem:[%s426 + $0xb0] sm:$0x7f]
        %v452 = vld [vmem:[%s426 + $0xb8] sm:$0x7f]
        %v453 = vld [vmem:[%s426 + $0xc0] sm:$0x7f]
        %v454 = vld [vmem:[%s426 + $0xc8] sm:$0x7f]
        %v455 = vld [vmem:[%s426 + $0xd0] sm:$0x7f]
        %v456 = vld [vmem:[%s426 + $0xd8] sm:$0x7f]
        %v457 = vld [vmem:[%s426 + $0xe0] sm:$0x7f]
        %v458 = vld [vmem:[%s426 + $0xe8] sm:$0x7f]
        %v459 = vld [vmem:[%s426 + $0xf0] sm:$0x7f]
        %v460 = vld [vmem:[%s426 + $0xf8] sm:$0x7f]
        %v461 = vld [vmem:[%s426 + $0x100] sm:$0x7f]
        %v462 = vld [vmem:[%s426 + $0x108] sm:$0x7f]
        %v463 = vld [vmem:[%s426 + $0x110] sm:$0x7f]
        %v464 = vld [vmem:[%s426 + $0x118] sm:$0x7f]
        %v465 = vld [vmem:[%s426 + $0x120] sm:$0x7f]
        %v466 = vld [vmem:[%s426 + $0x128] sm:$0x7f]
        %v467 = vld [vmem:[%s426 + $0x130] sm:$0x7f]
        %v468 = vld [vmem:[%s426 + $0x138] sm:$0x7f]
        %v469 = vld [vmem:[%s426 + $0x140] sm:$0x7f]
        %v470 = vld [vmem:[%s426 + $0x148] sm:$0x7f]
        %v471 = vld [vmem:[%s426 + $0x150] sm:$0x7f]
        %v472 = vld [vmem:[%s426 + $0x158] sm:$0x7f]
        %v473 = vld [vmem:[%s426 + $0x160] sm:$0x7f]
        %v474 = vld [vmem:[%s426 + $0x168] sm:$0x7f]
        %v475 = vld [vmem:[%s426 + $0x170] sm:$0x7f]
        %v476 = vld [vmem:[%s426 + $0x178] sm:$0x7f]
        %v477 = vld [vmem:[%s426 + $0x180] sm:$0x7f]
        %v478 = vld [vmem:[%s426 + $0x188] sm:$0x7f]
        %v479 = vld [vmem:[%s426 + $0x190] sm:$0x7f]
        %v480 = vld [vmem:[%s426 + $0x198] sm:$0x7f]
        %v481 = vld [vmem:[%s426 + $0x1a0] sm:$0x7f]
        %v482 = vld [vmem:[%s426 + $0x1a8] sm:$0x7f]
        %v483 = vld [vmem:[%s426 + $0x1b0] sm:$0x7f]
        %v484 = vld [vmem:[%s426 + $0x1b8] sm:$0x7f]
        %v485 = vld [vmem:[%s1] sm:$0xf]
        %v486 = vld [vmem:[%s1 + $0x4] sm:$0xf]
        %v487 = vld [vmem:[%s1 + $0x8] sm:$0xf]
        %v488 = vld [vmem:[%s1 + $0xc] sm:$0xf]
        %v489 = vld [vmem:[%s1 + $0x10] sm:$0xf]
        %v490 = vld [vmem:[%s1 + $0x14] sm:$0xf]
        %v491 = vld [vmem:[%s1 + $0x18] sm:$0xf]
        %v492 = vld [vmem:[%s1 + $0x1c] sm:$0xf]
        %v493 = vld [vmem:[%s1 + $0x20] sm:$0xf]
        %v494 = vld [vmem:[%s1 + $0x24] sm:$0xf]
        %v495 = vld [vmem:[%s1 + $0x28] sm:$0xf]
        %v496 = vld [vmem:[%s1 + $0x2c] sm:$0xf]
        %v497 = vld [vmem:[%s1 + $0x30] sm:$0xf]
        %v498 = vld [vmem:[%s1 + $0x34] sm:$0xf]
        %v499 = vld [vmem:[%s1 + $0x38] sm:$0xf]
        %v500 = vld [vmem:[%s1 + $0x3c] sm:$0xf]
        %v533 = vcombine.low %v429, %v430
        %v534 = vcombine.low %v431, %v432
        %v535 = vcombine.low %v436, %v437
        %v536 = vcombine.low %v438, %v439
        %v537 = vcombine.low %v443, %v444
        %v538 = vcombine.low %v445, %v446
        %v539 = vcombine.low %v450, %v451
        %v540 = vcombine.low %v452, %v453
        %v541 = vcombine.low %v457, %v458
        %v542 = vcombine.low %v459, %v460
        %v543 = vcombine.low %v464, %v465
        %v544 = vcombine.low %v466, %v467
        %v545 = vcombine.low %v471, %v472
        %v546 = vcombine.low %v473, %v474
        %v547 = vcombine.low %v478, %v479
        %v548 = vcombine.low %v480, %v481
        %v565 = vpack.c.bf16 %v534, %v533
        %v566 = vpack.c.bf16 %v536, %v535
        %v567 = vpack.c.bf16 %v538, %v537
        %v568 = vpack.c.bf16 %v540, %v539
        %v569 = vpack.c.bf16 %v542, %v541
        %v570 = vpack.c.bf16 %v544, %v543
        %v571 = vpack.c.bf16 %v546, %v545
        %v572 = vpack.c.bf16 %v548, %v547
        %v589 = vunpack.c.l.b16 %v485
        %v590 = vunpack.c.l.b16 %v486
        %v591 = vunpack.c.l.b16 %v487
        %v592 = vunpack.c.l.b16 %v488
        %v593 = vunpack.c.l.b16 %v489
        %v594 = vunpack.c.l.b16 %v490
        %v595 = vunpack.c.l.b16 %v491
        %v596 = vunpack.c.l.b16 %v492
        %v597 = vunpack.c.l.b16 %v493
        %v598 = vunpack.c.l.b16 %v494
        %v599 = vunpack.c.l.b16 %v495
        %v600 = vunpack.c.l.b16 %v496
        %v601 = vunpack.c.l.b16 %v497
        %v602 = vunpack.c.l.b16 %v498
        %v603 = vunpack.c.l.b16 %v499
        %v604 = vunpack.c.l.b16 %v500
        %v605 = vpack.c.b16 %v590, %v589
        %v606 = vpack.c.b16 %v592, %v591
        %v607 = vpack.c.b16 %v594, %v593
        %v608 = vpack.c.b16 %v596, %v595
        %v609 = vpack.c.b16 %v598, %v597
        %v610 = vpack.c.b16 %v600, %v599
        %v611 = vpack.c.b16 %v602, %v601
        %v612 = vpack.c.b16 %v604, %v603
        %621 = vmatprep.subr.bf16.mxu0 0
        %622 = vmatpush1.bf16.msra.mxu0 %v612
        %623 = vmatprep.subr.bf16.mxu0 0
        %624 = vmatpush1.bf16.msra.mxu0 %v611
        %625 = vmatprep.subr.bf16.mxu0 0
        %626 = vmatpush1.bf16.msra.mxu0 %v610
        %627 = vmatprep.subr.bf16.mxu0 0
        %628 = vmatpush1.bf16.msra.mxu0 %v609
        %629 = vmatprep.subr.bf16.mxu0 0
        %630 = vmatpush1.bf16.msra.mxu0 %v608
        %631 = vmatprep.subr.bf16.mxu0 0
        %632 = vmatpush1.bf16.msra.mxu0 %v607
        %633 = vmatprep.subr.bf16.mxu0 0
        %634 = vmatpush1.bf16.msra.mxu0 %v606
        %635 = vmatprep.subr.bf16.mxu0 0
        %636 = vmatpush1.bf16.msra.mxu0 %v605
        %637 = vmatprep.subr.bf16.mxu0 0
        %638 = vmatpush2.bf16.msra.mxu0 0
        %639 = vmatprep.subr.bf16.mxu0 0
        %640 = vmatpush2.bf16.msra.mxu0 0
        %641 = vmatprep.subr.bf16.mxu0 0
        %642 = vmatpush2.bf16.msra.mxu0 0
        %643 = vmatprep.subr.bf16.mxu0 0
        %644 = vmatpush2.bf16.msra.mxu0 0
        %645 = vmatprep.subr.bf16.mxu0 0
        %646 = vmatpush2.bf16.msra.mxu0 0
        %647 = vmatprep.subr.bf16.mxu0 0
        %648 = vmatpush2.bf16.msra.mxu0 0
        %649 = vmatprep.subr.bf16.mxu0 0
        %650 = vmatpush2.bf16.msra.mxu0 0
        %651 = vmatprep.subr.bf16.mxu0 0
        %652 = vmatpush2.bf16.msra.mxu0 0
        %653 = vmatprep.mubr.bf16.mxu0 0
        %654 = vmatmul.mubr.bf16.gmra.mxu0 %v565
        %v655 = vpop.f32.mrf.mxu0
        %v656 = vadd.f32 0.0, %v655
        %v657 = vpop.f32.mrf.mxu0
        %v658 = vpop.f32.mrf.mxu0
        %v659 = vadd.f32 0.0, %v658
        %v660 = vpop.f32.mrf.mxu0
        %661 = vmatprep.mubr.bf16.mxu0 0
        %662 = vmatmul.mubr.bf16.gmra.mxu0 %v566
        %v663 = vpop.f32.mrf.mxu0
        %v664 = vadd.f32 0.0, %v663
        %v665 = vpop.f32.mrf.mxu0
        %v666 = vpop.f32.mrf.mxu0
        %v667 = vadd.f32 0.0, %v666
        %v668 = vpop.f32.mrf.mxu0
        %669 = vmatprep.mubr.bf16.mxu0 0
        %670 = vmatmul.mubr.bf16.gmra.mxu0 %v567
        %v671 = vpop.f32.mrf.mxu0
        %v672 = vadd.f32 0.0, %v671
        %v673 = vpop.f32.mrf.mxu0
        %v674 = vpop.f32.mrf.mxu0
        %v675 = vadd.f32 0.0, %v674
        %v676 = vpop.f32.mrf.mxu0
        %677 = vmatprep.mubr.bf16.mxu0 0
        %678 = vmatmul.mubr.bf16.gmra.mxu0 %v568
        %v679 = vpop.f32.mrf.mxu0
        %v680 = vadd.f32 0.0, %v679
        %v681 = vpop.f32.mrf.mxu0
        %v682 = vpop.f32.mrf.mxu0
        %v683 = vadd.f32 0.0, %v682
        %v684 = vpop.f32.mrf.mxu0
        %685 = vmatprep.mubr.bf16.mxu0 0
        %686 = vmatmul.mubr.bf16.gmra.mxu0 %v569
        %v687 = vpop.f32.mrf.mxu0
        %v688 = vadd.f32 0.0, %v687
        %v689 = vpop.f32.mrf.mxu0
        %v690 = vpop.f32.mrf.mxu0
        %v691 = vadd.f32 0.0, %v690
        %v692 = vpop.f32.mrf.mxu0
        %693 = vmatprep.mubr.bf16.mxu0 0
        %694 = vmatmul.mubr.bf16.gmra.mxu0 %v570
        %v695 = vpop.f32.mrf.mxu0
        %v696 = vadd.f32 0.0, %v695
        %v697 = vpop.f32.mrf.mxu0
        %v698 = vpop.f32.mrf.mxu0
        %v699 = vadd.f32 0.0, %v698
        %v700 = vpop.f32.mrf.mxu0
        %701 = vmatprep.mubr.bf16.mxu0 0
        %702 = vmatmul.mubr.bf16.gmra.mxu0 %v571
        %v703 = vpop.f32.mrf.mxu0
        %v704 = vadd.f32 0.0, %v703
        %v705 = vpop.f32.mrf.mxu0
        %v706 = vpop.f32.mrf.mxu0
        %v707 = vadd.f32 0.0, %v706
        %v708 = vpop.f32.mrf.mxu0
        %709 = vmatprep.mubr.bf16.mxu0 0
        %710 = vmatmul.mubr.bf16.gmra.mxu0 %v572
        %v711 = vpop.f32.mrf.mxu0
        %v712 = vadd.f32 0.0, %v711
        %v713 = vpop.f32.mrf.mxu0
        %v714 = vpop.f32.mrf.mxu0
        %v715 = vadd.f32 0.0, %v714
        %v716 = vpop.f32.mrf.mxu0
        %717 = vdwg.mxu0
        %v718 = vmax.f32 %v656, 0.0
        %v719 = vmax.f32 %v659, 0.0
        %v720 = vmax.f32 %v664, 0.0
        %v721 = vmax.f32 %v667, 0.0
        %v722 = vmax.f32 %v672, 0.0
        %v723 = vmax.f32 %v675, 0.0
        %v724 = vmax.f32 %v680, 0.0
        %v725 = vmax.f32 %v683, 0.0
        %v726 = vmax.f32 %v688, 0.0
        %v727 = vmax.f32 %v691, 0.0
        %v728 = vmax.f32 %v696, 0.0
        %v729 = vmax.f32 %v699, 0.0
        %v730 = vmax.f32 %v704, 0.0
        %v731 = vmax.f32 %v707, 0.0
        %v732 = vmax.f32 %v712, 0.0
        %v733 = vmax.f32 %v715, 0.0
        %v750 = vcombine.high %v718, %v718
        %v752 = vunpack.c.l.s4 1983009808
        %v753 = vunpack.c.0.s8 %v752
        %v754 = vlaneseq
        %v755 = vshrl.u32 %v754, 7
        %v756 = vsub.s32 %v753, %v755
        %v757 = vrot.slane %v718, %v756
        %v759 = vunpack.c.l.s4 1983009808
        %v760 = vunpack.c.0.s8 %v759
        %v761 = vlaneseq
        %v762 = vshrl.u32 %v761, 7
        %v763 = vsub.s32 %v760, %v762
        %v764 = vrot.slane %v750, %v763
        %v765 = vcombine.high %v757, %v757
        %v766 = vcombine.high %v764, %v764
        %v767 = vcombine.high %v719, %v719
        %v769 = vunpack.c.l.s4 1983009808
        %v770 = vunpack.c.0.s8 %v769
        %v771 = vlaneseq
        %v772 = vshrl.u32 %v771, 7
        %v773 = vsub.s32 %v770, %v772
        %v774 = vrot.slane %v719, %v773
        %v776 = vunpack.c.l.s4 1983009808
        %v777 = vunpack.c.0.s8 %v776
        %v778 = vlaneseq
        %v779 = vshrl.u32 %v778, 7
        %v780 = vsub.s32 %v777, %v779
        %v781 = vrot.slane %v767, %v780
        %v782 = vcombine.high %v774, %v774
        %v783 = vcombine.high %v781, %v781
        %v784 = vcombine.high %v720, %v720
        %v786 = vunpack.c.l.s4 1983009808
        %v787 = vunpack.c.0.s8 %v786
        %v788 = vlaneseq
        %v789 = vshrl.u32 %v788, 7
        %v790 = vsub.s32 %v787, %v789
        %v791 = vrot.slane %v720, %v790
        %v793 = vunpack.c.l.s4 1983009808
        %v794 = vunpack.c.0.s8 %v793
        %v795 = vlaneseq
        %v796 = vshrl.u32 %v795, 7
        %v797 = vsub.s32 %v794, %v796
        %v798 = vrot.slane %v784, %v797
        %v799 = vcombine.high %v791, %v791
        %v800 = vcombine.high %v798, %v798
        %v801 = vcombine.high %v721, %v721
        %v803 = vunpack.c.l.s4 1983009808
        %v804 = vunpack.c.0.s8 %v803
        %v805 = vlaneseq
        %v806 = vshrl.u32 %v805, 7
        %v807 = vsub.s32 %v804, %v806
        %v808 = vrot.slane %v721, %v807
        %v810 = vunpack.c.l.s4 1983009808
        %v811 = vunpack.c.0.s8 %v810
        %v812 = vlaneseq
        %v813 = vshrl.u32 %v812, 7
        %v814 = vsub.s32 %v811, %v813
        %v815 = vrot.slane %v801, %v814
        %v816 = vcombine.high %v808, %v808
        %v817 = vcombine.high %v815, %v815
        %v818 = vcombine.high %v722, %v722
        %v820 = vunpack.c.l.s4 1983009808
        %v821 = vunpack.c.0.s8 %v820
        %v822 = vlaneseq
        %v823 = vshrl.u32 %v822, 7
        %v824 = vsub.s32 %v821, %v823
        %v825 = vrot.slane %v722, %v824
        %v827 = vunpack.c.l.s4 1983009808
        %v828 = vunpack.c.0.s8 %v827
        %v829 = vlaneseq
        %v830 = vshrl.u32 %v829, 7
        %v831 = vsub.s32 %v828, %v830
        %v832 = vrot.slane %v818, %v831
        %v833 = vcombine.high %v825, %v825
        %v834 = vcombine.high %v832, %v832
        %v835 = vcombine.high %v723, %v723
        %v837 = vunpack.c.l.s4 1983009808
        %v838 = vunpack.c.0.s8 %v837
        %v839 = vlaneseq
        %v840 = vshrl.u32 %v839, 7
        %v841 = vsub.s32 %v838, %v840
        %v842 = vrot.slane %v723, %v841
        %v844 = vunpack.c.l.s4 1983009808
        %v845 = vunpack.c.0.s8 %v844
        %v846 = vlaneseq
        %v847 = vshrl.u32 %v846, 7
        %v848 = vsub.s32 %v845, %v847
        %v849 = vrot.slane %v835, %v848
        %v850 = vcombine.high %v842, %v842
        %v851 = vcombine.high %v849, %v849
        %v852 = vcombine.high %v724, %v724
        %v854 = vunpack.c.l.s4 1983009808
        %v855 = vunpack.c.0.s8 %v854
        %v856 = vlaneseq
        %v857 = vshrl.u32 %v856, 7
        %v858 = vsub.s32 %v855, %v857
        %v859 = vrot.slane %v724, %v858
        %v861 = vunpack.c.l.s4 1983009808
        %v862 = vunpack.c.0.s8 %v861
        %v863 = vlaneseq
        %v864 = vshrl.u32 %v863, 7
        %v865 = vsub.s32 %v862, %v864
        %v866 = vrot.slane %v852, %v865
        %v867 = vcombine.high %v859, %v859
        %v868 = vcombine.high %v866, %v866
        %v869 = vcombine.high %v725, %v725
        %v871 = vunpack.c.l.s4 1983009808
        %v872 = vunpack.c.0.s8 %v871
        %v873 = vlaneseq
        %v874 = vshrl.u32 %v873, 7
        %v875 = vsub.s32 %v872, %v874
        %v876 = vrot.slane %v725, %v875
        %v878 = vunpack.c.l.s4 1983009808
        %v879 = vunpack.c.0.s8 %v878
        %v880 = vlaneseq
        %v881 = vshrl.u32 %v880, 7
        %v882 = vsub.s32 %v879, %v881
        %v883 = vrot.slane %v869, %v882
        %v884 = vcombine.high %v876, %v876
        %v885 = vcombine.high %v883, %v883
        %v886 = vcombine.high %v726, %v726
        %v888 = vunpack.c.l.s4 1983009808
        %v889 = vunpack.c.0.s8 %v888
        %v890 = vlaneseq
        %v891 = vshrl.u32 %v890, 7
        %v892 = vsub.s32 %v889, %v891
        %v893 = vrot.slane %v726, %v892
        %v895 = vunpack.c.l.s4 1983009808
        %v896 = vunpack.c.0.s8 %v895
        %v897 = vlaneseq
        %v898 = vshrl.u32 %v897, 7
        %v899 = vsub.s32 %v896, %v898
        %v900 = vrot.slane %v886, %v899
        %v901 = vcombine.high %v893, %v893
        %v902 = vcombine.high %v900, %v900
        %v903 = vcombine.high %v727, %v727
        %v905 = vunpack.c.l.s4 1983009808
        %v906 = vunpack.c.0.s8 %v905
        %v907 = vlaneseq
        %v908 = vshrl.u32 %v907, 7
        %v909 = vsub.s32 %v906, %v908
        %v910 = vrot.slane %v727, %v909
        %v912 = vunpack.c.l.s4 1983009808
        %v913 = vunpack.c.0.s8 %v912
        %v914 = vlaneseq
        %v915 = vshrl.u32 %v914, 7
        %v916 = vsub.s32 %v913, %v915
        %v917 = vrot.slane %v903, %v916
        %v918 = vcombine.high %v910, %v910
        %v919 = vcombine.high %v917, %v917
        %v920 = vcombine.high %v728, %v728
        %v922 = vunpack.c.l.s4 1983009808
        %v923 = vunpack.c.0.s8 %v922
        %v924 = vlaneseq
        %v925 = vshrl.u32 %v924, 7
        %v926 = vsub.s32 %v923, %v925
        %v927 = vrot.slane %v728, %v926
        %v929 = vunpack.c.l.s4 1983009808
        %v930 = vunpack.c.0.s8 %v929
        %v931 = vlaneseq
        %v932 = vshrl.u32 %v931, 7
        %v933 = vsub.s32 %v930, %v932
        %v934 = vrot.slane %v920, %v933
        %v935 = vcombine.high %v927, %v927
        %v936 = vcombine.high %v934, %v934
        %v937 = vcombine.high %v729, %v729
        %v939 = vunpack.c.l.s4 1983009808
        %v940 = vunpack.c.0.s8 %v939
        %v941 = vlaneseq
        %v942 = vshrl.u32 %v941, 7
        %v943 = vsub.s32 %v940, %v942
        %v944 = vrot.slane %v729, %v943
        %v946 = vunpack.c.l.s4 1983009808
        %v947 = vunpack.c.0.s8 %v946
        %v948 = vlaneseq
        %v949 = vshrl.u32 %v948, 7
        %v950 = vsub.s32 %v947, %v949
        %v951 = vrot.slane %v937, %v950
        %v952 = vcombine.high %v944, %v944
        %v953 = vcombine.high %v951, %v951
        %v954 = vcombine.high %v730, %v730
        %v956 = vunpack.c.l.s4 1983009808
        %v957 = vunpack.c.0.s8 %v956
        %v958 = vlaneseq
        %v959 = vshrl.u32 %v958, 7
        %v960 = vsub.s32 %v957, %v959
        %v961 = vrot.slane %v730, %v960
        %v963 = vunpack.c.l.s4 1983009808
        %v964 = vunpack.c.0.s8 %v963
        %v965 = vlaneseq
        %v966 = vshrl.u32 %v965, 7
        %v967 = vsub.s32 %v964, %v966
        %v968 = vrot.slane %v954, %v967
        %v969 = vcombine.high %v961, %v961
        %v970 = vcombine.high %v968, %v968
        %v971 = vcombine.high %v731, %v731
        %v973 = vunpack.c.l.s4 1983009808
        %v974 = vunpack.c.0.s8 %v973
        %v975 = vlaneseq
        %v976 = vshrl.u32 %v975, 7
        %v977 = vsub.s32 %v974, %v976
        %v978 = vrot.slane %v731, %v977
        %v980 = vunpack.c.l.s4 1983009808
        %v981 = vunpack.c.0.s8 %v980
        %v982 = vlaneseq
        %v983 = vshrl.u32 %v982, 7
        %v984 = vsub.s32 %v981, %v983
        %v985 = vrot.slane %v971, %v984
        %v986 = vcombine.high %v978, %v978
        %v987 = vcombine.high %v985, %v985
        %v988 = vcombine.high %v732, %v732
        %v990 = vunpack.c.l.s4 1983009808
        %v991 = vunpack.c.0.s8 %v990
        %v992 = vlaneseq
        %v993 = vshrl.u32 %v992, 7
        %v994 = vsub.s32 %v991, %v993
        %v995 = vrot.slane %v732, %v994
        %v997 = vunpack.c.l.s4 1983009808
        %v998 = vunpack.c.0.s8 %v997
        %v999 = vlaneseq
        %v1000 = vshrl.u32 %v999, 7
        %v1001 = vsub.s32 %v998, %v1000
        %v1002 = vrot.slane %v988, %v1001
        %v1003 = vcombine.high %v995, %v995
        %v1004 = vcombine.high %v1002, %v1002
        %v1005 = vcombine.high %v733, %v733
        %v1007 = vunpack.c.l.s4 1983009808
        %v1008 = vunpack.c.0.s8 %v1007
        %v1009 = vlaneseq
        %v1010 = vshrl.u32 %v1009, 7
        %v1011 = vsub.s32 %v1008, %v1010
        %v1012 = vrot.slane %v733, %v1011
        %v1014 = vunpack.c.l.s4 1983009808
        %v1015 = vunpack.c.0.s8 %v1014
        %v1016 = vlaneseq
        %v1017 = vshrl.u32 %v1016, 7
        %v1018 = vsub.s32 %v1015, %v1017
        %v1019 = vrot.slane %v1005, %v1018
        %v1020 = vcombine.high %v1012, %v1012
        %v1021 = vcombine.high %v1019, %v1019
        %v1086 = vrot.slane %v757, 7
        %v1087 = vrot.slane %v1086, 2
        %v1088 = vrot.slane %v765, 7
        %v1089 = vrot.slane %v1088, 2
        %v1090 = vrot.slane %v764, 7
        %v1091 = vrot.slane %v1090, 2
        %v1092 = vrot.slane %v766, 7
        %v1093 = vrot.slane %v1092, 2
        %v1094 = vrot.slane %v774, 7
        %v1095 = vrot.slane %v1094, 2
        %v1096 = vrot.slane %v782, 7
        %v1097 = vrot.slane %v1096, 2
        %v1098 = vrot.slane %v781, 7
        %v1099 = vrot.slane %v1098, 2
        %v1100 = vrot.slane %v783, 7
        %v1101 = vrot.slane %v1100, 2
        %v1102 = vrot.slane %v791, 7
        %v1103 = vrot.slane %v1102, 2
        %v1104 = vrot.slane %v799, 7
        %v1105 = vrot.slane %v1104, 2
        %v1106 = vrot.slane %v798, 7
        %v1107 = vrot.slane %v1106, 2
        %v1108 = vrot.slane %v800, 7
        %v1109 = vrot.slane %v1108, 2
        %v1110 = vrot.slane %v808, 7
        %v1111 = vrot.slane %v1110, 2
        %v1112 = vrot.slane %v816, 7
        %v1113 = vrot.slane %v1112, 2
        %v1114 = vrot.slane %v815, 7
        %v1115 = vrot.slane %v1114, 2
        %v1116 = vrot.slane %v817, 7
        %v1117 = vrot.slane %v1116, 2
        %v1118 = vrot.slane %v825, 7
        %v1119 = vrot.slane %v1118, 2
        %v1120 = vrot.slane %v833, 7
        %v1121 = vrot.slane %v1120, 2
        %v1122 = vrot.slane %v832, 7
        %v1123 = vrot.slane %v1122, 2
        %v1124 = vrot.slane %v834, 7
        %v1125 = vrot.slane %v1124, 2
        %v1126 = vrot.slane %v842, 7
        %v1127 = vrot.slane %v1126, 2
        %v1128 = vrot.slane %v850, 7
        %v1129 = vrot.slane %v1128, 2
        %v1130 = vrot.slane %v849, 7
        %v1131 = vrot.slane %v1130, 2
        %v1132 = vrot.slane %v851, 7
        %v1133 = vrot.slane %v1132, 2
        %v1134 = vrot.slane %v859, 7
        %v1135 = vrot.slane %v1134, 2
        %v1136 = vrot.slane %v867, 7
        %v1137 = vrot.slane %v1136, 2
        %v1138 = vrot.slane %v866, 7
        %v1139 = vrot.slane %v1138, 2
        %v1140 = vrot.slane %v868, 7
        %v1141 = vrot.slane %v1140, 2
        %v1142 = vrot.slane %v876, 7
        %v1143 = vrot.slane %v1142, 2
        %v1144 = vrot.slane %v884, 7
        %v1145 = vrot.slane %v1144, 2
        %v1146 = vrot.slane %v883, 7
        %v1147 = vrot.slane %v1146, 2
        %v1148 = vrot.slane %v885, 7
        %v1149 = vrot.slane %v1148, 2
        %v1150 = vrot.slane %v893, 7
        %v1151 = vrot.slane %v1150, 2
        %v1152 = vrot.slane %v901, 7
        %v1153 = vrot.slane %v1152, 2
        %v1154 = vrot.slane %v900, 7
        %v1155 = vrot.slane %v1154, 2
        %v1156 = vrot.slane %v902, 7
        %v1157 = vrot.slane %v1156, 2
        %v1158 = vrot.slane %v910, 7
        %v1159 = vrot.slane %v1158, 2
        %v1160 = vrot.slane %v918, 7
        %v1161 = vrot.slane %v1160, 2
        %v1162 = vrot.slane %v917, 7
        %v1163 = vrot.slane %v1162, 2
        %v1164 = vrot.slane %v919, 7
        %v1165 = vrot.slane %v1164, 2
        %v1166 = vrot.slane %v927, 7
        %v1167 = vrot.slane %v1166, 2
        %v1168 = vrot.slane %v935, 7
        %v1169 = vrot.slane %v1168, 2
        %v1170 = vrot.slane %v934, 7
        %v1171 = vrot.slane %v1170, 2
        %v1172 = vrot.slane %v936, 7
        %v1173 = vrot.slane %v1172, 2
        %v1174 = vrot.slane %v944, 7
        %v1175 = vrot.slane %v1174, 2
        %v1176 = vrot.slane %v952, 7
        %v1177 = vrot.slane %v1176, 2
        %v1178 = vrot.slane %v951, 7
        %v1179 = vrot.slane %v1178, 2
        %v1180 = vrot.slane %v953, 7
        %v1181 = vrot.slane %v1180, 2
        %v1182 = vrot.slane %v961, 7
        %v1183 = vrot.slane %v1182, 2
        %v1184 = vrot.slane %v969, 7
        %v1185 = vrot.slane %v1184, 2
        %v1186 = vrot.slane %v968, 7
        %v1187 = vrot.slane %v1186, 2
        %v1188 = vrot.slane %v970, 7
        %v1189 = vrot.slane %v1188, 2
        %v1190 = vrot.slane %v978, 7
        %v1191 = vrot.slane %v1190, 2
        %v1192 = vrot.slane %v986, 7
        %v1193 = vrot.slane %v1192, 2
        %v1194 = vrot.slane %v985, 7
        %v1195 = vrot.slane %v1194, 2
        %v1196 = vrot.slane %v987, 7
        %v1197 = vrot.slane %v1196, 2
        %v1198 = vrot.slane %v995, 7
        %v1199 = vrot.slane %v1198, 2
        %v1200 = vrot.slane %v1003, 7
        %v1201 = vrot.slane %v1200, 2
        %v1202 = vrot.slane %v1002, 7
        %v1203 = vrot.slane %v1202, 2
        %v1204 = vrot.slane %v1004, 7
        %v1205 = vrot.slane %v1204, 2
        %v1206 = vrot.slane %v1012, 7
        %v1207 = vrot.slane %v1206, 2
        %v1208 = vrot.slane %v1020, 7
        %v1209 = vrot.slane %v1208, 2
        %v1210 = vrot.slane %v1019, 7
        %v1211 = vrot.slane %v1210, 2
        %v1212 = vrot.slane %v1021, 7
        %v1213 = vrot.slane %v1212, 2
        %v1278 = vmax.f32 %v757, %v1087
        %v1279 = vmax.f32 %v765, %v1089
        %v1280 = vmax.f32 %v764, %v1091
        %v1281 = vmax.f32 %v766, %v1093
        %v1282 = vmax.f32 %v774, %v1095
        %v1283 = vmax.f32 %v782, %v1097
        %v1284 = vmax.f32 %v781, %v1099
        %v1285 = vmax.f32 %v783, %v1101
        %v1286 = vmax.f32 %v791, %v1103
        %v1287 = vmax.f32 %v799, %v1105
        %v1288 = vmax.f32 %v798, %v1107
        %v1289 = vmax.f32 %v800, %v1109
        %v1290 = vmax.f32 %v808, %v1111
        %v1291 = vmax.f32 %v816, %v1113
        %v1292 = vmax.f32 %v815, %v1115
        %v1293 = vmax.f32 %v817, %v1117
        %v1294 = vmax.f32 %v825, %v1119
        %v1295 = vmax.f32 %v833, %v1121
        %v1296 = vmax.f32 %v832, %v1123
        %v1297 = vmax.f32 %v834, %v1125
        %v1298 = vmax.f32 %v842, %v1127
        %v1299 = vmax.f32 %v850, %v1129
        %v1300 = vmax.f32 %v849, %v1131
        %v1301 = vmax.f32 %v851, %v1133
        %v1302 = vmax.f32 %v859, %v1135
        %v1303 = vmax.f32 %v867, %v1137
        %v1304 = vmax.f32 %v866, %v1139
        %v1305 = vmax.f32 %v868, %v1141
        %v1306 = vmax.f32 %v876, %v1143
        %v1307 = vmax.f32 %v884, %v1145
        %v1308 = vmax.f32 %v883, %v1147
        %v1309 = vmax.f32 %v885, %v1149
        %v1310 = vmax.f32 %v893, %v1151
        %v1311 = vmax.f32 %v901, %v1153
        %v1312 = vmax.f32 %v900, %v1155
        %v1313 = vmax.f32 %v902, %v1157
        %v1314 = vmax.f32 %v910, %v1159
        %v1315 = vmax.f32 %v918, %v1161
        %v1316 = vmax.f32 %v917, %v1163
        %v1317 = vmax.f32 %v919, %v1165
        %v1318 = vmax.f32 %v927, %v1167
        %v1319 = vmax.f32 %v935, %v1169
        %v1320 = vmax.f32 %v934, %v1171
        %v1321 = vmax.f32 %v936, %v1173
        %v1322 = vmax.f32 %v944, %v1175
        %v1323 = vmax.f32 %v952, %v1177
        %v1324 = vmax.f32 %v951, %v1179
        %v1325 = vmax.f32 %v953, %v1181
        %v1326 = vmax.f32 %v961, %v1183
        %v1327 = vmax.f32 %v969, %v1185
        %v1328 = vmax.f32 %v968, %v1187
        %v1329 = vmax.f32 %v970, %v1189
        %v1330 = vmax.f32 %v978, %v1191
        %v1331 = vmax.f32 %v986, %v1193
        %v1332 = vmax.f32 %v985, %v1195
        %v1333 = vmax.f32 %v987, %v1197
        %v1334 = vmax.f32 %v995, %v1199
        %v1335 = vmax.f32 %v1003, %v1201
        %v1336 = vmax.f32 %v1002, %v1203
        %v1337 = vmax.f32 %v1004, %v1205
        %v1338 = vmax.f32 %v1012, %v1207
        %v1339 = vmax.f32 %v1020, %v1209
        %v1340 = vmax.f32 %v1019, %v1211
        %v1341 = vmax.f32 %v1021, %v1213
        %v1342 = vmax.f32 %v1278, %v1280
        %v1343 = vmax.f32 %v1279, %v1281
        %v1344 = vmax.f32 %v1282, %v1284
        %v1345 = vmax.f32 %v1283, %v1285
        %v1346 = vmax.f32 %v1286, %v1288
        %v1347 = vmax.f32 %v1287, %v1289
        %v1348 = vmax.f32 %v1290, %v1292
        %v1349 = vmax.f32 %v1291, %v1293
        %v1350 = vmax.f32 %v1294, %v1296
        %v1351 = vmax.f32 %v1295, %v1297
        %v1352 = vmax.f32 %v1298, %v1300
        %v1353 = vmax.f32 %v1299, %v1301
        %v1354 = vmax.f32 %v1302, %v1304
        %v1355 = vmax.f32 %v1303, %v1305
        %v1356 = vmax.f32 %v1306, %v1308
        %v1357 = vmax.f32 %v1307, %v1309
        %v1358 = vmax.f32 %v1310, %v1312
        %v1359 = vmax.f32 %v1311, %v1313
        %v1360 = vmax.f32 %v1314, %v1316
        %v1361 = vmax.f32 %v1315, %v1317
        %v1362 = vmax.f32 %v1318, %v1320
        %v1363 = vmax.f32 %v1319, %v1321
        %v1364 = vmax.f32 %v1322, %v1324
        %v1365 = vmax.f32 %v1323, %v1325
        %v1366 = vmax.f32 %v1326, %v1328
        %v1367 = vmax.f32 %v1327, %v1329
        %v1368 = vmax.f32 %v1330, %v1332
        %v1369 = vmax.f32 %v1331, %v1333
        %v1370 = vmax.f32 %v1334, %v1336
        %v1371 = vmax.f32 %v1335, %v1337
        %v1372 = vmax.f32 %v1338, %v1340
        %v1373 = vmax.f32 %v1339, %v1341
        %v1374 = vld [vmem:[%s2] sm:$0xf]
        %v1375 = vld [vmem:[%s2 + $0x4] sm:$0xf]
        %v1376 = vld [vmem:[%s2 + $0x8] sm:$0xf]
        %v1377 = vld [vmem:[%s2 + $0xc] sm:$0xf]
        %v1378 = vld [vmem:[%s2 + $0x10] sm:$0xf]
        %v1379 = vld [vmem:[%s2 + $0x14] sm:$0xf]
        %v1380 = vld [vmem:[%s2 + $0x18] sm:$0xf]
        %v1381 = vld [vmem:[%s2 + $0x1c] sm:$0xf]
        %v1382 = vpack.c.bf16 %v1342, %v1342
        %v1383 = vpack.c.bf16 %v1343, %v1343
        %v1384 = vpack.c.bf16 %v1344, %v1344
        %v1385 = vpack.c.bf16 %v1345, %v1345
        %v1386 = vpack.c.bf16 %v1346, %v1346
        %v1387 = vpack.c.bf16 %v1347, %v1347
        %v1388 = vpack.c.bf16 %v1348, %v1348
        %v1389 = vpack.c.bf16 %v1349, %v1349
        %v1390 = vpack.c.bf16 %v1350, %v1350
        %v1391 = vpack.c.bf16 %v1351, %v1351
        %v1392 = vpack.c.bf16 %v1352, %v1352
        %v1393 = vpack.c.bf16 %v1353, %v1353
        %v1394 = vpack.c.bf16 %v1354, %v1354
        %v1395 = vpack.c.bf16 %v1355, %v1355
        %v1396 = vpack.c.bf16 %v1356, %v1356
        %v1397 = vpack.c.bf16 %v1357, %v1357
        %v1398 = vpack.c.bf16 %v1358, %v1358
        %v1399 = vpack.c.bf16 %v1359, %v1359
        %v1400 = vpack.c.bf16 %v1360, %v1360
        %v1401 = vpack.c.bf16 %v1361, %v1361
        %v1402 = vpack.c.bf16 %v1362, %v1362
        %v1403 = vpack.c.bf16 %v1363, %v1363
        %v1404 = vpack.c.bf16 %v1364, %v1364
        %v1405 = vpack.c.bf16 %v1365, %v1365
        %v1406 = vpack.c.bf16 %v1366, %v1366
        %v1407 = vpack.c.bf16 %v1367, %v1367
        %v1408 = vpack.c.bf16 %v1368, %v1368
        %v1409 = vpack.c.bf16 %v1369, %v1369
        %v1410 = vpack.c.bf16 %v1370, %v1370
        %v1411 = vpack.c.bf16 %v1371, %v1371
        %v1412 = vpack.c.bf16 %v1372, %v1372
        %v1413 = vpack.c.bf16 %v1373, %v1373
        %v1446 = vunpack.c.l.b16 %v1382
        %v1447 = vunpack.c.l.b16 %v1383
        %v1448 = vunpack.c.l.b16 %v1384
        %v1449 = vunpack.c.l.b16 %v1385
        %v1450 = vunpack.c.l.b16 %v1386
        %v1451 = vunpack.c.l.b16 %v1387
        %v1452 = vunpack.c.l.b16 %v1388
        %v1453 = vunpack.c.l.b16 %v1389
        %v1454 = vunpack.c.l.b16 %v1390
        %v1455 = vunpack.c.l.b16 %v1391
        %v1456 = vunpack.c.l.b16 %v1392
        %v1457 = vunpack.c.l.b16 %v1393
        %v1458 = vunpack.c.l.b16 %v1394
        %v1459 = vunpack.c.l.b16 %v1395
        %v1460 = vunpack.c.l.b16 %v1396
        %v1461 = vunpack.c.l.b16 %v1397
        %v1462 = vunpack.c.l.b16 %v1398
        %v1463 = vunpack.c.l.b16 %v1399
        %v1464 = vunpack.c.l.b16 %v1400
        %v1465 = vunpack.c.l.b16 %v1401
        %v1466 = vunpack.c.l.b16 %v1402
        %v1467 = vunpack.c.l.b16 %v1403
        %v1468 = vunpack.c.l.b16 %v1404
        %v1469 = vunpack.c.l.b16 %v1405
        %v1470 = vunpack.c.l.b16 %v1406
        %v1471 = vunpack.c.l.b16 %v1407
        %v1472 = vunpack.c.l.b16 %v1408
        %v1473 = vunpack.c.l.b16 %v1409
        %v1474 = vunpack.c.l.b16 %v1410
        %v1475 = vunpack.c.l.b16 %v1411
        %v1476 = vunpack.c.l.b16 %v1412
        %v1477 = vunpack.c.l.b16 %v1413
        %v1478 = vrot.slane %v1447, 7
        %vm1479 = vcmask 1041409
        %v1480 = vsel %vm1479, %v1478, %v1446
        %v1481 = vrot.slane %v1448, 6
        %vm1482 = vcmask 1042434
        %v1483 = vsel %vm1482, %v1481, %v1480
        %v1484 = vrot.slane %v1449, 5
        %vm1485 = vcmask 1043459
        %v1486 = vsel %vm1485, %v1484, %v1483
        %v1487 = vrot.slane %v1450, 4
        %vm1488 = vcmask 1044484
        %v1489 = vsel %vm1488, %v1487, %v1486
        %v1490 = vrot.slane %v1451, 3
        %vm1491 = vcmask 1045509
        %v1492 = vsel %vm1491, %v1490, %v1489
        %v1493 = vrot.slane %v1452, 2
        %vm1494 = vcmask 1046534
        %v1495 = vsel %vm1494, %v1493, %v1492
        %v1496 = vrot.slane %v1453, 1
        %vm1497 = vcmask 1047559
        %v1498 = vsel %vm1497, %v1496, %v1495
        %v1499 = vrot.slane %v1455, 7
        %v1500 = vsel %vm1479, %v1499, %v1454
        %v1501 = vrot.slane %v1456, 6
        %v1502 = vsel %vm1482, %v1501, %v1500
        %v1503 = vrot.slane %v1457, 5
        %v1504 = vsel %vm1485, %v1503, %v1502
        %v1505 = vrot.slane %v1458, 4
        %v1506 = vsel %vm1488, %v1505, %v1504
        %v1507 = vrot.slane %v1459, 3
        %v1508 = vsel %vm1491, %v1507, %v1506
        %v1509 = vrot.slane %v1460, 2
        %v1510 = vsel %vm1494, %v1509, %v1508
        %v1511 = vrot.slane %v1461, 1
        %v1512 = vsel %vm1497, %v1511, %v1510
        %v1513 = vrot.slane %v1463, 7
        %v1514 = vsel %vm1479, %v1513, %v1462
        %v1515 = vrot.slane %v1464, 6
        %v1516 = vsel %vm1482, %v1515, %v1514
        %v1517 = vrot.slane %v1465, 5
        %v1518 = vsel %vm1485, %v1517, %v1516
        %v1519 = vrot.slane %v1466, 4
        %v1520 = vsel %vm1488, %v1519, %v1518
        %v1521 = vrot.slane %v1467, 3
        %v1522 = vsel %vm1491, %v1521, %v1520
        %v1523 = vrot.slane %v1468, 2
        %v1524 = vsel %vm1494, %v1523, %v1522
        %v1525 = vrot.slane %v1469, 1
        %v1526 = vsel %vm1497, %v1525, %v1524
        %v1527 = vrot.slane %v1471, 7
        %v1528 = vsel %vm1479, %v1527, %v1470
        %v1529 = vrot.slane %v1472, 6
        %v1530 = vsel %vm1482, %v1529, %v1528
        %v1531 = vrot.slane %v1473, 5
        %v1532 = vsel %vm1485, %v1531, %v1530
        %v1533 = vrot.slane %v1474, 4
        %v1534 = vsel %vm1488, %v1533, %v1532
        %v1535 = vrot.slane %v1475, 3
        %v1536 = vsel %vm1491, %v1535, %v1534
        %v1537 = vrot.slane %v1476, 2
        %v1538 = vsel %vm1494, %v1537, %v1536
        %v1539 = vrot.slane %v1477, 1
        %v1540 = vsel %vm1497, %v1539, %v1538
        %v1541 = vpack.c.b16 %v1512, %v1498
        %v1542 = vpack.c.b16 %v1540, %v1526
        %v1551 = vunpack.c.l.b16 %v1374
        %v1552 = vunpack.c.l.b16 %v1375
        %v1553 = vunpack.c.l.b16 %v1376
        %v1554 = vunpack.c.l.b16 %v1377
        %v1555 = vunpack.c.l.b16 %v1378
        %v1556 = vunpack.c.l.b16 %v1379
        %v1557 = vunpack.c.l.b16 %v1380
        %v1558 = vunpack.c.l.b16 %v1381
        %v1559 = vpack.c.b16 %v1552, %v1551
        %v1560 = vpack.c.b16 %v1554, %v1553
        %v1561 = vpack.c.b16 %v1556, %v1555
        %v1562 = vpack.c.b16 %v1558, %v1557
        %vm1567 = vcmask 523264
        %v1569 = vsel %vm1567, %v1541, 0
        %v1572 = vsel %vm1567, %v1542, 0
        %1574 = vmatprep.subr.bf16.mxu0 0
        %1575 = vmatpush1.bf16.msra.mxu0 0
        %1576 = vmatprep.subr.bf16.mxu0 0
        %1577 = vmatpush1.bf16.msra.mxu0 0
        %1578 = vmatprep.subr.bf16.mxu0 0
        %1579 = vmatpush1.bf16.msra.mxu0 0
        %1580 = vmatprep.subr.bf16.mxu0 0
        %1581 = vmatpush1.bf16.msra.mxu0 0
        %1582 = vmatprep.subr.bf16.mxu0 0
        %1583 = vmatpush1.bf16.msra.mxu0 %v1562
        %1584 = vmatprep.subr.bf16.mxu0 0
        %1585 = vmatpush1.bf16.msra.mxu0 %v1561
        %1586 = vmatprep.subr.bf16.mxu0 0
        %1587 = vmatpush1.bf16.msra.mxu0 %v1560
        %1588 = vmatprep.subr.bf16.mxu0 0
        %1589 = vmatpush1.bf16.msra.mxu0 %v1559
        %1590 = vmatprep.subr.bf16.mxu0 0
        %1591 = vmatpush2.bf16.msra.mxu0 0
        %1592 = vmatprep.subr.bf16.mxu0 0
        %1593 = vmatpush2.bf16.msra.mxu0 0
        %1594 = vmatprep.subr.bf16.mxu0 0
        %1595 = vmatpush2.bf16.msra.mxu0 0
        %1596 = vmatprep.subr.bf16.mxu0 0
        %1597 = vmatpush2.bf16.msra.mxu0 0
        %1598 = vmatprep.subr.bf16.mxu0 0
        %1599 = vmatpush2.bf16.msra.mxu0 0
        %1600 = vmatprep.subr.bf16.mxu0 0
        %1601 = vmatpush2.bf16.msra.mxu0 0
        %1602 = vmatprep.subr.bf16.mxu0 0
        %1603 = vmatpush2.bf16.msra.mxu0 0
        %1604 = vmatprep.subr.bf16.mxu0 0
        %1605 = vmatpush2.bf16.msra.mxu0 0
        %1606 = vmatprep.mubr.bf16.mxu0 0
        %1607 = vmatmul.mubr.bf16.gmra.mxu0 %v1569
        %v1608 = vpop.f32.mrf.mxu0
        %v1609 = vadd.f32 0.0, %v1608
        %v1610 = vpop.f32.mrf.mxu0
        %v1611 = vpop.f32.mrf.mxu0
        %v1612 = vadd.f32 0.0, %v1611
        %v1613 = vpop.f32.mrf.mxu0
        %1614 = vmatprep.mubr.bf16.mxu0 0
        %1615 = vmatmul.mubr.bf16.gmra.mxu0 %v1572
        %v1616 = vpop.f32.mrf.mxu0
        %v1617 = vadd.f32 0.0, %v1616
        %v1618 = vpop.f32.mrf.mxu0
        %v1619 = vpop.f32.mrf.mxu0
        %v1620 = vadd.f32 0.0, %v1619
        %v1621 = vpop.f32.mrf.mxu0
        %1622 = vdwg.mxu0
        %v1623 = vmax.f32 %v1609, 0.0
        %v1624 = vmax.f32 %v1612, 0.0
        %v1625 = vmax.f32 %v1617, 0.0
        %v1626 = vmax.f32 %v1620, 0.0
        %v1631 = vcombine.high %v1623, %v1623
        %v1633 = vunpack.c.l.s4 1983009808
        %v1634 = vunpack.c.0.s8 %v1633
        %v1635 = vlaneseq
        %v1636 = vshrl.u32 %v1635, 7
        %v1637 = vsub.s32 %v1634, %v1636
        %v1638 = vrot.slane %v1623, %v1637
        %v1640 = vunpack.c.l.s4 1983009808
        %v1641 = vunpack.c.0.s8 %v1640
        %v1642 = vlaneseq
        %v1643 = vshrl.u32 %v1642, 7
        %v1644 = vsub.s32 %v1641, %v1643
        %v1645 = vrot.slane %v1631, %v1644
        %v1646 = vcombine.high %v1638, %v1638
        %v1647 = vcombine.high %v1645, %v1645
        %v1648 = vcombine.high %v1624, %v1624
        %v1650 = vunpack.c.l.s4 1983009808
        %v1651 = vunpack.c.0.s8 %v1650
        %v1652 = vlaneseq
        %v1653 = vshrl.u32 %v1652, 7
        %v1654 = vsub.s32 %v1651, %v1653
        %v1655 = vrot.slane %v1624, %v1654
        %v1657 = vunpack.c.l.s4 1983009808
        %v1658 = vunpack.c.0.s8 %v1657
        %v1659 = vlaneseq
        %v1660 = vshrl.u32 %v1659, 7
        %v1661 = vsub.s32 %v1658, %v1660
        %v1662 = vrot.slane %v1648, %v1661
        %v1663 = vcombine.high %v1655, %v1655
        %v1664 = vcombine.high %v1662, %v1662
        %v1665 = vcombine.high %v1625, %v1625
        %v1667 = vunpack.c.l.s4 1983009808
        %v1668 = vunpack.c.0.s8 %v1667
        %v1669 = vlaneseq
        %v1670 = vshrl.u32 %v1669, 7
        %v1671 = vsub.s32 %v1668, %v1670
        %v1672 = vrot.slane %v1625, %v1671
        %v1674 = vunpack.c.l.s4 1983009808
        %v1675 = vunpack.c.0.s8 %v1674
        %v1676 = vlaneseq
        %v1677 = vshrl.u32 %v1676, 7
        %v1678 = vsub.s32 %v1675, %v1677
        %v1679 = vrot.slane %v1665, %v1678
        %v1680 = vcombine.high %v1672, %v1672
        %v1681 = vcombine.high %v1679, %v1679
        %v1682 = vcombine.high %v1626, %v1626
        %v1684 = vunpack.c.l.s4 1983009808
        %v1685 = vunpack.c.0.s8 %v1684
        %v1686 = vlaneseq
        %v1687 = vshrl.u32 %v1686, 7
        %v1688 = vsub.s32 %v1685, %v1687
        %v1689 = vrot.slane %v1626, %v1688
        %v1691 = vunpack.c.l.s4 1983009808
        %v1692 = vunpack.c.0.s8 %v1691
        %v1693 = vlaneseq
        %v1694 = vshrl.u32 %v1693, 7
        %v1695 = vsub.s32 %v1692, %v1694
        %v1696 = vrot.slane %v1682, %v1695
        %v1697 = vcombine.high %v1689, %v1689
        %v1698 = vcombine.high %v1696, %v1696
        %v1715 = vrot.slane %v1638, 7
        %v1716 = vrot.slane %v1715, 2
        %v1717 = vrot.slane %v1646, 7
        %v1718 = vrot.slane %v1717, 2
        %v1719 = vrot.slane %v1645, 7
        %v1720 = vrot.slane %v1719, 2
        %v1721 = vrot.slane %v1647, 7
        %v1722 = vrot.slane %v1721, 2
        %v1723 = vrot.slane %v1655, 7
        %v1724 = vrot.slane %v1723, 2
        %v1725 = vrot.slane %v1663, 7
        %v1726 = vrot.slane %v1725, 2
        %v1727 = vrot.slane %v1662, 7
        %v1728 = vrot.slane %v1727, 2
        %v1729 = vrot.slane %v1664, 7
        %v1730 = vrot.slane %v1729, 2
        %v1731 = vrot.slane %v1672, 7
        %v1732 = vrot.slane %v1731, 2
        %v1733 = vrot.slane %v1680, 7
        %v1734 = vrot.slane %v1733, 2
        %v1735 = vrot.slane %v1679, 7
        %v1736 = vrot.slane %v1735, 2
        %v1737 = vrot.slane %v1681, 7
        %v1738 = vrot.slane %v1737, 2
        %v1739 = vrot.slane %v1689, 7
        %v1740 = vrot.slane %v1739, 2
        %v1741 = vrot.slane %v1697, 7
        %v1742 = vrot.slane %v1741, 2
        %v1743 = vrot.slane %v1696, 7
        %v1744 = vrot.slane %v1743, 2
        %v1745 = vrot.slane %v1698, 7
        %v1746 = vrot.slane %v1745, 2
        %v1763 = vmax.f32 %v1638, %v1716
        %v1764 = vmax.f32 %v1646, %v1718
        %v1765 = vmax.f32 %v1645, %v1720
        %v1766 = vmax.f32 %v1647, %v1722
        %v1767 = vmax.f32 %v1655, %v1724
        %v1768 = vmax.f32 %v1663, %v1726
        %v1769 = vmax.f32 %v1662, %v1728
        %v1770 = vmax.f32 %v1664, %v1730
        %v1771 = vmax.f32 %v1672, %v1732
        %v1772 = vmax.f32 %v1680, %v1734
        %v1773 = vmax.f32 %v1679, %v1736
        %v1774 = vmax.f32 %v1681, %v1738
        %v1775 = vmax.f32 %v1689, %v1740
        %v1776 = vmax.f32 %v1697, %v1742
        %v1777 = vmax.f32 %v1696, %v1744
        %v1778 = vmax.f32 %v1698, %v1746
        %v1779 = vmax.f32 %v1763, %v1764
        %v1780 = vmax.f32 %v1765, %v1766
        %v1781 = vmax.f32 %v1767, %v1768
        %v1782 = vmax.f32 %v1769, %v1770
        %v1783 = vmax.f32 %v1771, %v1772
        %v1784 = vmax.f32 %v1773, %v1774
        %v1785 = vmax.f32 %v1775, %v1776
        %v1786 = vmax.f32 %v1777, %v1778
        %v1787 = vld [vmem:[%s3] sm:$0xf]
        %v1788 = vld [vmem:[%s3 + $0x4] sm:$0xf]
        %v1789 = vld [vmem:[%s3 + $0x8] sm:$0xf]
        %v1790 = vld [vmem:[%s3 + $0xc] sm:$0xf]
        %v1791 = vld [vmem:[%s3 + $0x10] sm:$0xf]
        %v1792 = vld [vmem:[%s3 + $0x14] sm:$0xf]
        %v1793 = vld [vmem:[%s3 + $0x18] sm:$0xf]
        %v1794 = vld [vmem:[%s3 + $0x1c] sm:$0xf]
        %v1795 = vpack.c.bf16 %v1779, %v1779
        %v1796 = vpack.c.bf16 %v1780, %v1780
        %v1797 = vpack.c.bf16 %v1781, %v1781
        %v1798 = vpack.c.bf16 %v1782, %v1782
        %v1799 = vpack.c.bf16 %v1783, %v1783
        %v1800 = vpack.c.bf16 %v1784, %v1784
        %v1801 = vpack.c.bf16 %v1785, %v1785
        %v1802 = vpack.c.bf16 %v1786, %v1786
        %v1803 = vld [vmem:[%s4] sm:$0x1]
        %v1805 = vlaneseq
        %v1806 = vshrl.u32 %v1805, 7
        %v1807 = vsub.s32 0, %v1806
        %v1808 = vrot.slane %v1803, %v1807
        %v1818 = vunpack.c.l.b16 %v1795
        %v1819 = vunpack.c.l.b16 %v1796
        %v1820 = vunpack.c.l.b16 %v1797
        %v1821 = vunpack.c.l.b16 %v1798
        %v1822 = vunpack.c.l.b16 %v1799
        %v1823 = vunpack.c.l.b16 %v1800
        %v1824 = vunpack.c.l.b16 %v1801
        %v1825 = vunpack.c.l.b16 %v1802
        %v1826 = vrot.slane %v1819, 7
        %v1827 = vsel %vm1479, %v1826, %v1818
        %v1828 = vrot.slane %v1820, 6
        %v1829 = vsel %vm1482, %v1828, %v1827
        %v1830 = vrot.slane %v1821, 5
        %v1831 = vsel %vm1485, %v1830, %v1829
        %v1832 = vrot.slane %v1822, 4
        %v1833 = vsel %vm1488, %v1832, %v1831
        %v1834 = vrot.slane %v1823, 3
        %v1835 = vsel %vm1491, %v1834, %v1833
        %v1836 = vrot.slane %v1824, 2
        %v1837 = vsel %vm1494, %v1836, %v1835
        %v1838 = vrot.slane %v1825, 1
        %v1839 = vsel %vm1497, %v1838, %v1837
        %v1840 = vpack.c.b16 %v1839, %v1839
        %v1849 = vunpack.c.l.b16 %v1787
        %v1850 = vunpack.c.l.b16 %v1788
        %v1851 = vunpack.c.l.b16 %v1789
        %v1852 = vunpack.c.l.b16 %v1790
        %v1853 = vunpack.c.l.b16 %v1791
        %v1854 = vunpack.c.l.b16 %v1792
        %v1855 = vunpack.c.l.b16 %v1793
        %v1856 = vunpack.c.l.b16 %v1794
        %v1857 = vpack.c.b16 %v1850, %v1849
        %v1858 = vpack.c.b16 %v1852, %v1851
        %v1859 = vpack.c.b16 %v1854, %v1853
        %v1860 = vpack.c.b16 %v1856, %v1855
        %v1866 = vsel %vm1567, %v1840, 0
        %1868 = vmatprep.subr.bf16.mxu0 0
        %1869 = vmatpush1.bf16.msra.mxu0 0
        %1870 = vmatprep.subr.bf16.mxu0 0
        %1871 = vmatpush1.bf16.msra.mxu0 0
        %1872 = vmatprep.subr.bf16.mxu0 0
        %1873 = vmatpush1.bf16.msra.mxu0 0
        %1874 = vmatprep.subr.bf16.mxu0 0
        %1875 = vmatpush1.bf16.msra.mxu0 0
        %1876 = vmatprep.subr.bf16.mxu0 0
        %1877 = vmatpush1.bf16.msra.mxu0 %v1860
        %1878 = vmatprep.subr.bf16.mxu0 0
        %1879 = vmatpush1.bf16.msra.mxu0 %v1859
        %1880 = vmatprep.subr.bf16.mxu0 0
        %1881 = vmatpush1.bf16.msra.mxu0 %v1858
        %1882 = vmatprep.subr.bf16.mxu0 0
        %1883 = vmatpush1.bf16.msra.mxu0 %v1857
        %1884 = vmatprep.subr.bf16.mxu0 0
        %1885 = vmatpush2.bf16.msra.mxu0 0
        %1886 = vmatprep.subr.bf16.mxu0 0
        %1887 = vmatpush2.bf16.msra.mxu0 0
        %1888 = vmatprep.subr.bf16.mxu0 0
        %1889 = vmatpush2.bf16.msra.mxu0 0
        %1890 = vmatprep.subr.bf16.mxu0 0
        %1891 = vmatpush2.bf16.msra.mxu0 0
        %1892 = vmatprep.subr.bf16.mxu0 0
        %1893 = vmatpush2.bf16.msra.mxu0 0
        %1894 = vmatprep.subr.bf16.mxu0 0
        %1895 = vmatpush2.bf16.msra.mxu0 0
        %1896 = vmatprep.subr.bf16.mxu0 0
        %1897 = vmatpush2.bf16.msra.mxu0 0
        %1898 = vmatprep.subr.bf16.mxu0 0
        %1899 = vmatpush2.bf16.msra.mxu0 0
        %1900 = vmatprep.mubr.bf16.mxu0 0
        %1901 = vmatmul.mubr.bf16.gmra.mxu0 %v1866
        %v1902 = vpop.f32.mrf.mxu0
        %v1903 = vadd.f32 %v1808, %v1902
        %v1904 = vpop.f32.mrf.mxu0
        %v1905 = vpop.f32.mrf.mxu0
        %v1906 = vpop.f32.mrf.mxu0
        %1907 = vdwg.mxu0
        %v1908 = vld [vmem:[%s5] sm:$0xf]
        %v1909 = vld [vmem:[%s5 + $0x4] sm:$0xf]
        %v1910 = vld [vmem:[%s5 + $0x8] sm:$0xf]
        %v1911 = vld [vmem:[%s5 + $0xc] sm:$0xf]
        %v1912 = vld [vmem:[%s5 + $0x10] sm:$0xf]
        %v1913 = vld [vmem:[%s5 + $0x14] sm:$0xf]
        %v1914 = vld [vmem:[%s5 + $0x18] sm:$0xf]
        %v1915 = vld [vmem:[%s5 + $0x1c] sm:$0xf]
        %v1916 = vpack.c.bf16 %v1903, %v1903
        %v1917 = vld [vmem:[%s6] sm:$0x1]
        %v1919 = vlaneseq
        %v1920 = vshrl.u32 %v1919, 7
        %v1921 = vsub.s32 0, %v1920
        %v1922 = vrot.slane %v1917, %v1921
        %v1932 = vunpack.c.l.b16 %v1908
        %v1933 = vunpack.c.l.b16 %v1909
        %v1934 = vunpack.c.l.b16 %v1910
        %v1935 = vunpack.c.l.b16 %v1911
        %v1936 = vunpack.c.l.b16 %v1912
        %v1937 = vunpack.c.l.b16 %v1913
        %v1938 = vunpack.c.l.b16 %v1914
        %v1939 = vunpack.c.l.b16 %v1915
        %v1940 = vpack.c.b16 %v1933, %v1932
        %v1941 = vpack.c.b16 %v1935, %v1934
        %v1942 = vpack.c.b16 %v1937, %v1936
        %v1943 = vpack.c.b16 %v1939, %v1938
        %v1949 = vsel %vm1567, %v1916, 0
        %1951 = vmatprep.subr.bf16.mxu0 0
        %1952 = vmatpush1.bf16.msra.mxu0 0
        %1953 = vmatprep.subr.bf16.mxu0 0
        %1954 = vmatpush1.bf16.msra.mxu0 0
        %1955 = vmatprep.subr.bf16.mxu0 0
        %1956 = vmatpush1.bf16.msra.mxu0 0
        %1957 = vmatprep.subr.bf16.mxu0 0
        %1958 = vmatpush1.bf16.msra.mxu0 0
        %1959 = vmatprep.subr.bf16.mxu0 0
        %1960 = vmatpush1.bf16.msra.mxu0 %v1943
        %1961 = vmatprep.subr.bf16.mxu0 0
        %1962 = vmatpush1.bf16.msra.mxu0 %v1942
        %1963 = vmatprep.subr.bf16.mxu0 0
        %1964 = vmatpush1.bf16.msra.mxu0 %v1941
        %1965 = vmatprep.subr.bf16.mxu0 0
        %1966 = vmatpush1.bf16.msra.mxu0 %v1940
        %1967 = vmatprep.subr.bf16.mxu0 0
        %1968 = vmatpush2.bf16.msra.mxu0 0
        %1969 = vmatprep.subr.bf16.mxu0 0
        %1970 = vmatpush2.bf16.msra.mxu0 0
        %1971 = vmatprep.subr.bf16.mxu0 0
        %1972 = vmatpush2.bf16.msra.mxu0 0
        %1973 = vmatprep.subr.bf16.mxu0 0
        %1974 = vmatpush2.bf16.msra.mxu0 0
        %1975 = vmatprep.subr.bf16.mxu0 0
        %1976 = vmatpush2.bf16.msra.mxu0 0
        %1977 = vmatprep.subr.bf16.mxu0 0
        %1978 = vmatpush2.bf16.msra.mxu0 0
        %1979 = vmatprep.subr.bf16.mxu0 0
        %1980 = vmatpush2.bf16.msra.mxu0 0
        %1981 = vmatprep.subr.bf16.mxu0 0
        %1982 = vmatpush2.bf16.msra.mxu0 0
        %1983 = vmatprep.mubr.bf16.mxu0 0
        %1984 = vmatmul.mubr.bf16.gmra.mxu0 %v1949
        %v1985 = vpop.f32.mrf.mxu0
        %v1986 = vadd.f32 %v1922, %v1985
        %v1987 = vpop.f32.mrf.mxu0
        %v1988 = vpop.f32.mrf.mxu0
        %v1989 = vpop.f32.mrf.mxu0
        %1990 = vdwg.mxu0
        %1991 = vst [vmem:[%s413] sm:$0xff] %v1986
        %vm1992 = vcmask 1046528
        %v1993 = vsel %vm1992, %v429, 0.0
        %v1994 = vsel %vm1992, %v430, 0.0
        %v1995 = vadd.f32 %v1993, %v1994
        %v1996 = vsel %vm1992, %v431, 0.0
        %v1997 = vadd.f32 %v1995, %v1996
        %v1998 = vsel %vm1992, %v432, 0.0
        %v1999 = vadd.f32 %v1997, %v1998
        %v2000 = vsel %vm1992, %v433, 0.0
        %v2001 = vadd.f32 %v1999, %v2000
        %v2002 = vsel %vm1992, %v434, 0.0
        %v2003 = vadd.f32 %v2001, %v2002
        %v2004 = vsel %vm1992, %v435, 0.0
        %v2005 = vadd.f32 %v2003, %v2004
        %v2006 = vrot.slane %v2005, 4
        %v2007 = vadd.f32 %v2005, %v2006
        %v2008 = vrot.slane %v2007, 2
        %v2009 = vadd.f32 %v2007, %v2008
        %v2010 = vrot.slane %v2009, 1
        %v2011 = vadd.f32 %v2009, %v2010
        %v2012 = vsel %vm1992, %v436, 0.0
        %v2013 = vsel %vm1992, %v437, 0.0
        %v2014 = vadd.f32 %v2012, %v2013
        %v2015 = vsel %vm1992, %v438, 0.0
        %v2016 = vadd.f32 %v2014, %v2015
        %v2017 = vsel %vm1992, %v439, 0.0
        %v2018 = vadd.f32 %v2016, %v2017
        %v2019 = vsel %vm1992, %v440, 0.0
        %v2020 = vadd.f32 %v2018, %v2019
        %v2021 = vsel %vm1992, %v441, 0.0
        %v2022 = vadd.f32 %v2020, %v2021
        %v2023 = vsel %vm1992, %v442, 0.0
        %v2024 = vadd.f32 %v2022, %v2023
        %v2025 = vrot.slane %v2024, 4
        %v2026 = vadd.f32 %v2024, %v2025
        %v2027 = vrot.slane %v2026, 2
        %v2028 = vadd.f32 %v2026, %v2027
        %v2029 = vrot.slane %v2028, 1
        %v2030 = vadd.f32 %v2028, %v2029
        %v2031 = vsel %vm1992, %v443, 0.0
        %v2032 = vsel %vm1992, %v444, 0.0
        %v2033 = vadd.f32 %v2031, %v2032
        %v2034 = vsel %vm1992, %v445, 0.0
        %v2035 = vadd.f32 %v2033, %v2034
        %v2036 = vsel %vm1992, %v446, 0.0
        %v2037 = vadd.f32 %v2035, %v2036
        %v2038 = vsel %vm1992, %v447, 0.0
        %v2039 = vadd.f32 %v2037, %v2038
        %v2040 = vsel %vm1992, %v448, 0.0
        %v2041 = vadd.f32 %v2039, %v2040
        %v2042 = vsel %vm1992, %v449, 0.0
        %v2043 = vadd.f32 %v2041, %v2042
        %v2044 = vrot.slane %v2043, 4
        %v2045 = vadd.f32 %v2043, %v2044
        %v2046 = vrot.slane %v2045, 2
        %v2047 = vadd.f32 %v2045, %v2046
        %v2048 = vrot.slane %v2047, 1
        %v2049 = vadd.f32 %v2047, %v2048
        %v2050 = vsel %vm1992, %v450, 0.0
        %v2051 = vsel %vm1992, %v451, 0.0
        %v2052 = vadd.f32 %v2050, %v2051
        %v2053 = vsel %vm1992, %v452, 0.0
        %v2054 = vadd.f32 %v2052, %v2053
        %v2055 = vsel %vm1992, %v453, 0.0
        %v2056 = vadd.f32 %v2054, %v2055
        %v2057 = vsel %vm1992, %v454, 0.0
        %v2058 = vadd.f32 %v2056, %v2057
        %v2059 = vsel %vm1992, %v455, 0.0
        %v2060 = vadd.f32 %v2058, %v2059
        %v2061 = vsel %vm1992, %v456, 0.0
        %v2062 = vadd.f32 %v2060, %v2061
        %v2063 = vrot.slane %v2062, 4
        %v2064 = vadd.f32 %v2062, %v2063
        %v2065 = vrot.slane %v2064, 2
        %v2066 = vadd.f32 %v2064, %v2065
        %v2067 = vrot.slane %v2066, 1
        %v2068 = vadd.f32 %v2066, %v2067
        %v2069 = vsel %vm1992, %v457, 0.0
        %v2070 = vsel %vm1992, %v458, 0.0
        %v2071 = vadd.f32 %v2069, %v2070
        %v2072 = vsel %vm1992, %v459, 0.0
        %v2073 = vadd.f32 %v2071, %v2072
        %v2074 = vsel %vm1992, %v460, 0.0
        %v2075 = vadd.f32 %v2073, %v2074
        %v2076 = vsel %vm1992, %v461, 0.0
        %v2077 = vadd.f32 %v2075, %v2076
        %v2078 = vsel %vm1992, %v462, 0.0
        %v2079 = vadd.f32 %v2077, %v2078
        %v2080 = vsel %vm1992, %v463, 0.0
        %v2081 = vadd.f32 %v2079, %v2080
        %v2082 = vrot.slane %v2081, 4
        %v2083 = vadd.f32 %v2081, %v2082
        %v2084 = vrot.slane %v2083, 2
        %v2085 = vadd.f32 %v2083, %v2084
        %v2086 = vrot.slane %v2085, 1
        %v2087 = vadd.f32 %v2085, %v2086
        %v2088 = vsel %vm1992, %v464, 0.0
        %v2089 = vsel %vm1992, %v465, 0.0
        %v2090 = vadd.f32 %v2088, %v2089
        %v2091 = vsel %vm1992, %v466, 0.0
        %v2092 = vadd.f32 %v2090, %v2091
        %v2093 = vsel %vm1992, %v467, 0.0
        %v2094 = vadd.f32 %v2092, %v2093
        %v2095 = vsel %vm1992, %v468, 0.0
        %v2096 = vadd.f32 %v2094, %v2095
        %v2097 = vsel %vm1992, %v469, 0.0
        %v2098 = vadd.f32 %v2096, %v2097
        %v2099 = vsel %vm1992, %v470, 0.0
        %v2100 = vadd.f32 %v2098, %v2099
        %v2101 = vrot.slane %v2100, 4
        %v2102 = vadd.f32 %v2100, %v2101
        %v2103 = vrot.slane %v2102, 2
        %v2104 = vadd.f32 %v2102, %v2103
        %v2105 = vrot.slane %v2104, 1
        %v2106 = vadd.f32 %v2104, %v2105
        %v2107 = vsel %vm1992, %v471, 0.0
        %v2108 = vsel %vm1992, %v472, 0.0
        %v2109 = vadd.f32 %v2107, %v2108
        %v2110 = vsel %vm1992, %v473, 0.0
        %v2111 = vadd.f32 %v2109, %v2110
        %v2112 = vsel %vm1992, %v474, 0.0
        %v2113 = vadd.f32 %v2111, %v2112
        %v2114 = vsel %vm1992, %v475, 0.0
        %v2115 = vadd.f32 %v2113, %v2114
        %v2116 = vsel %vm1992, %v476, 0.0
        %v2117 = vadd.f32 %v2115, %v2116
        %v2118 = vsel %vm1992, %v477, 0.0
        %v2119 = vadd.f32 %v2117, %v2118
        %v2120 = vrot.slane %v2119, 4
        %v2121 = vadd.f32 %v2119, %v2120
        %v2122 = vrot.slane %v2121, 2
        %v2123 = vadd.f32 %v2121, %v2122
        %v2124 = vrot.slane %v2123, 1
        %v2125 = vadd.f32 %v2123, %v2124
        %v2126 = vsel %vm1992, %v478, 0.0
        %v2127 = vsel %vm1992, %v479, 0.0
        %v2128 = vadd.f32 %v2126, %v2127
        %v2129 = vsel %vm1992, %v480, 0.0
        %v2130 = vadd.f32 %v2128, %v2129
        %v2131 = vsel %vm1992, %v481, 0.0
        %v2132 = vadd.f32 %v2130, %v2131
        %v2133 = vsel %vm1992, %v482, 0.0
        %v2134 = vadd.f32 %v2132, %v2133
        %v2135 = vsel %vm1992, %v483, 0.0
        %v2136 = vadd.f32 %v2134, %v2135
        %v2137 = vsel %vm1992, %v484, 0.0
        %v2138 = vadd.f32 %v2136, %v2137
        %v2139 = vrot.slane %v2138, 4
        %v2140 = vadd.f32 %v2138, %v2139
        %v2141 = vrot.slane %v2140, 2
        %v2142 = vadd.f32 %v2140, %v2141
        %v2143 = vrot.slane %v2142, 1
        %v2144 = vadd.f32 %v2142, %v2143
        %v2145 = vld [vmem:[%s7] sm:$0xf]
        %v2146 = vld [vmem:[%s7 + $0x4] sm:$0xf]
        %v2147 = vld [vmem:[%s7 + $0x8] sm:$0xf]
        %v2148 = vld [vmem:[%s7 + $0xc] sm:$0xf]
        %v2149 = vld [vmem:[%s7 + $0x10] sm:$0xf]
        %v2150 = vld [vmem:[%s7 + $0x14] sm:$0xf]
        %v2151 = vld [vmem:[%s7 + $0x18] sm:$0xf]
        %v2152 = vld [vmem:[%s7 + $0x1c] sm:$0xf]
        %v2153 = vld [vmem:[%s7 + $0x20] sm:$0xf]
        %v2154 = vld [vmem:[%s7 + $0x24] sm:$0xf]
        %v2155 = vld [vmem:[%s7 + $0x28] sm:$0xf]
        %v2156 = vld [vmem:[%s7 + $0x2c] sm:$0xf]
        %v2157 = vld [vmem:[%s7 + $0x30] sm:$0xf]
        %v2158 = vld [vmem:[%s7 + $0x34] sm:$0xf]
        %v2159 = vld [vmem:[%s7 + $0x38] sm:$0xf]
        %v2160 = vld [vmem:[%s7 + $0x3c] sm:$0xf]
        %v2161 = vpack.c.bf16 %v2011, %v2011
        %v2162 = vpack.c.bf16 %v2030, %v2030
        %v2163 = vpack.c.bf16 %v2049, %v2049
        %v2164 = vpack.c.bf16 %v2068, %v2068
        %v2165 = vpack.c.bf16 %v2087, %v2087
        %v2166 = vpack.c.bf16 %v2106, %v2106
        %v2167 = vpack.c.bf16 %v2125, %v2125
        %v2168 = vpack.c.bf16 %v2144, %v2144
        %v2169 = vld [vmem:[%s8] sm:$0x1]
        %v2171 = vlaneseq
        %v2172 = vshrl.u32 %v2171, 7
        %v2173 = vsub.s32 0, %v2172
        %v2174 = vrot.slane %v2169, %v2173
        %v2184 = vunpack.c.l.b16 %v2161
        %v2185 = vunpack.c.l.b16 %v2162
        %v2186 = vunpack.c.l.b16 %v2163
        %v2187 = vunpack.c.l.b16 %v2164
        %v2188 = vunpack.c.l.b16 %v2165
        %v2189 = vunpack.c.l.b16 %v2166
        %v2190 = vunpack.c.l.b16 %v2167
        %v2191 = vunpack.c.l.b16 %v2168
        %v2192 = vsel %vm1479, %v2185, %v2184
        %v2193 = vsel %vm1482, %v2186, %v2192
        %v2194 = vsel %vm1485, %v2187, %v2193
        %v2195 = vsel %vm1488, %v2188, %v2194
        %v2196 = vsel %vm1491, %v2189, %v2195
        %v2197 = vsel %vm1494, %v2190, %v2196
        %v2198 = vsel %vm1497, %v2191, %v2197
        %v2199 = vpack.c.b16 %v2198, %v2198
        %v2217 = vunpack.c.l.b16 %v2145
        %v2218 = vunpack.c.l.b16 %v2146
        %v2219 = vunpack.c.l.b16 %v2147
        %v2220 = vunpack.c.l.b16 %v2148
        %v2221 = vunpack.c.l.b16 %v2149
        %v2222 = vunpack.c.l.b16 %v2150
        %v2223 = vunpack.c.l.b16 %v2151
        %v2224 = vunpack.c.l.b16 %v2152
        %v2225 = vunpack.c.l.b16 %v2153
        %v2226 = vunpack.c.l.b16 %v2154
        %v2227 = vunpack.c.l.b16 %v2155
        %v2228 = vunpack.c.l.b16 %v2156
        %v2229 = vunpack.c.l.b16 %v2157
        %v2230 = vunpack.c.l.b16 %v2158
        %v2231 = vunpack.c.l.b16 %v2159
        %v2232 = vunpack.c.l.b16 %v2160
        %v2233 = vpack.c.b16 %v2218, %v2217
        %v2234 = vpack.c.b16 %v2220, %v2219
        %v2235 = vpack.c.b16 %v2222, %v2221
        %v2236 = vpack.c.b16 %v2224, %v2223
        %v2237 = vpack.c.b16 %v2226, %v2225
        %v2238 = vpack.c.b16 %v2228, %v2227
        %v2239 = vpack.c.b16 %v2230, %v2229
        %v2240 = vpack.c.b16 %v2232, %v2231
        %2249 = vmatprep.subr.bf16.mxu0 0
        %2250 = vmatpush1.bf16.msra.mxu0 %v2240
        %2251 = vmatprep.subr.bf16.mxu0 0
        %2252 = vmatpush1.bf16.msra.mxu0 %v2239
        %2253 = vmatprep.subr.bf16.mxu0 0
        %2254 = vmatpush1.bf16.msra.mxu0 %v2238
        %2255 = vmatprep.subr.bf16.mxu0 0
        %2256 = vmatpush1.bf16.msra.mxu0 %v2237
        %2257 = vmatprep.subr.bf16.mxu0 0
        %2258 = vmatpush1.bf16.msra.mxu0 %v2236
        %2259 = vmatprep.subr.bf16.mxu0 0
        %2260 = vmatpush1.bf16.msra.mxu0 %v2235
        %2261 = vmatprep.subr.bf16.mxu0 0
        %2262 = vmatpush1.bf16.msra.mxu0 %v2234
        %2263 = vmatprep.subr.bf16.mxu0 0
        %2264 = vmatpush1.bf16.msra.mxu0 %v2233
        %2265 = vmatprep.subr.bf16.mxu0 0
        %2266 = vmatpush2.bf16.msra.mxu0 0
        %2267 = vmatprep.subr.bf16.mxu0 0
        %2268 = vmatpush2.bf16.msra.mxu0 0
        %2269 = vmatprep.subr.bf16.mxu0 0
        %2270 = vmatpush2.bf16.msra.mxu0 0
        %2271 = vmatprep.subr.bf16.mxu0 0
        %2272 = vmatpush2.bf16.msra.mxu0 0
        %2273 = vmatprep.subr.bf16.mxu0 0
        %2274 = vmatpush2.bf16.msra.mxu0 0
        %2275 = vmatprep.subr.bf16.mxu0 0
        %2276 = vmatpush2.bf16.msra.mxu0 0
        %2277 = vmatprep.subr.bf16.mxu0 0
        %2278 = vmatpush2.bf16.msra.mxu0 0
        %2279 = vmatprep.subr.bf16.mxu0 0
        %2280 = vmatpush2.bf16.msra.mxu0 0
        %2281 = vmatprep.mubr.bf16.mxu0 0
        %2282 = vmatmul.mubr.bf16.gmra.mxu0 %v2199
        %v2283 = vpop.f32.mrf.mxu0
        %v2284 = vadd.f32 %v2174, %v2283
        %v2285 = vpop.f32.mrf.mxu0
        %v2286 = vpop.f32.mrf.mxu0
        %v2287 = vpop.f32.mrf.mxu0
        %2288 = vdwg.mxu0
        %v2289 = vld [vmem:[%s9] sm:$0xf]
        %v2290 = vld [vmem:[%s9 + $0x4] sm:$0xf]
        %v2291 = vld [vmem:[%s9 + $0x8] sm:$0xf]
        %v2292 = vld [vmem:[%s9 + $0xc] sm:$0xf]
        %v2293 = vld [vmem:[%s9 + $0x10] sm:$0xf]
        %v2294 = vld [vmem:[%s9 + $0x14] sm:$0xf]
        %v2295 = vld [vmem:[%s9 + $0x18] sm:$0xf]
        %v2296 = vld [vmem:[%s9 + $0x1c] sm:$0xf]
        %v2297 = vpack.c.bf16 %v2284, %v2284
        %v2298 = vld [vmem:[%s10] sm:$0x1]
        %v2300 = vlaneseq
        %v2301 = vshrl.u32 %v2300, 7
        %v2302 = vsub.s32 0, %v2301
        %v2303 = vrot.slane %v2298, %v2302
        %v2313 = vunpack.c.l.b16 %v2289
        %v2314 = vunpack.c.l.b16 %v2290
        %v2315 = vunpack.c.l.b16 %v2291
        %v2316 = vunpack.c.l.b16 %v2292
        %v2317 = vunpack.c.l.b16 %v2293
        %v2318 = vunpack.c.l.b16 %v2294
        %v2319 = vunpack.c.l.b16 %v2295
        %v2320 = vunpack.c.l.b16 %v2296
        %v2321 = vpack.c.b16 %v2314, %v2313
        %v2322 = vpack.c.b16 %v2316, %v2315
        %v2323 = vpack.c.b16 %v2318, %v2317
        %v2324 = vpack.c.b16 %v2320, %v2319
        %v2330 = vsel %vm1567, %v2297, 0
        %2332 = vmatprep.subr.bf16.mxu0 0
        %2333 = vmatpush1.bf16.msra.mxu0 0
        %2334 = vmatprep.subr.bf16.mxu0 0
        %2335 = vmatpush1.bf16.msra.mxu0 0
        %2336 = vmatprep.subr.bf16.mxu0 0
        %2337 = vmatpush1.bf16.msra.mxu0 0
        %2338 = vmatprep.subr.bf16.mxu0 0
        %2339 = vmatpush1.bf16.msra.mxu0 0
        %2340 = vmatprep.subr.bf16.mxu0 0
        %2341 = vmatpush1.bf16.msra.mxu0 %v2324
        %2342 = vmatprep.subr.bf16.mxu0 0
        %2343 = vmatpush1.bf16.msra.mxu0 %v2323
        %2344 = vmatprep.subr.bf16.mxu0 0
        %2345 = vmatpush1.bf16.msra.mxu0 %v2322
        %2346 = vmatprep.subr.bf16.mxu0 0
        %2347 = vmatpush1.bf16.msra.mxu0 %v2321
        %2348 = vmatprep.subr.bf16.mxu0 0
        %2349 = vmatpush2.bf16.msra.mxu0 0
        %2350 = vmatprep.subr.bf16.mxu0 0
        %2351 = vmatpush2.bf16.msra.mxu0 0
        %2352 = vmatprep.subr.bf16.mxu0 0
        %2353 = vmatpush2.bf16.msra.mxu0 0
        %2354 = vmatprep.subr.bf16.mxu0 0
        %2355 = vmatpush2.bf16.msra.mxu0 0
        %2356 = vmatprep.subr.bf16.mxu0 0
        %2357 = vmatpush2.bf16.msra.mxu0 0
        %2358 = vmatprep.subr.bf16.mxu0 0
        %2359 = vmatpush2.bf16.msra.mxu0 0
        %2360 = vmatprep.subr.bf16.mxu0 0
        %2361 = vmatpush2.bf16.msra.mxu0 0
        %2362 = vmatprep.subr.bf16.mxu0 0
        %2363 = vmatpush2.bf16.msra.mxu0 0
        %2364 = vmatprep.mubr.bf16.mxu0 0
        %2365 = vmatmul.mubr.bf16.gmra.mxu0 %v2330
        %v2366 = vpop.f32.mrf.mxu0
        %v2367 = vadd.f32 %v2303, %v2366
        %v2368 = vpop.f32.mrf.mxu0
        %v2369 = vpop.f32.mrf.mxu0
        %v2370 = vpop.f32.mrf.mxu0
        %2371 = vdwg.mxu0
        %2372 = vst [vmem:[%s420] sm:$0xff] %v2367
        %s2373 = sand.u32 %s274, 1
        %s2374 = scalar_lea.sflag [#allocation3], %s2373
        %s2375 = sand.u32 %s274, 1
        %s2376 = smul.addr %s2375, 8
        %s2377 = scalar_lea.vmem [#allocation2], %s2376
        %s2378 = sand.u32 %s300, 1
        %s2379 = scalar_lea.sflag [#allocation5], %s2378
        %s2380 = sand.u32 %s300, 1
        %s2381 = smul.addr %s2380, 8
        %s2382 = scalar_lea.vmem [#allocation4], %s2381
        // Predicated region
        $region65: #{tpu_custom_call.1} parent=63 // pred_check
          %p2383 = pneg %p284
        $region66: #{tpu_custom_call.1} parent=63 // pred_check_branch
          %2385 = sbr.rel (%p2383) target = $region68
        $region67: #{tpu_custom_call.1} parent=63 // pred_region
          %s2387 = ssub.s32 128, 128
          %2388 = vsyncadd %s2374, %s2387
          %s2389 = smul.addr %s30, 128
          %s2390 = scalar_lea.hbm %s11, %s2389
          %s2392 = sshll.u32 %s2377, 4
          %s2393 = int_to_ptr.vmem [resolvable:$true] %s2392
          %2395 = dma.vmem_to_hbm [thread:$0]  %s2393, 128, %s2390, %s2374
        $region68: #{tpu_custom_call.1} parent=63 // pred_fallthru
          _
        // Predicated region
        $region69: #{tpu_custom_call.1} parent=63 // pred_check
          %p2396 = pneg %p310
        $region70: #{tpu_custom_call.1} parent=63 // pred_check_branch
          %2398 = sbr.rel (%p2396) target = $region72
        $region71: #{tpu_custom_call.1} parent=63 // pred_region
          %s2400 = ssub.s32 128, 128
          %2401 = vsyncadd %s2379, %s2400
          %s2402 = smul.addr %s30, 128
          %s2403 = scalar_lea.hbm %s12, %s2402
          %s2405 = sshll.u32 %s2382, 4
          %s2406 = int_to_ptr.vmem [resolvable:$true] %s2405
          %2408 = dma.vmem_to_hbm [thread:$0]  %s2406, 128, %s2403, %s2379
        $region72: #{tpu_custom_call.1} parent=63 // pred_fallthru
          _
      $region64: #{tpu_custom_call.1} parent=5 // pred_fallthru
        _
      %p2409 = scmp.le.s32.totalorder 2, %s25
      // Predicated region
      $region73: #{tpu_custom_call.1} parent=5 // pred_check
        %p2410 = pneg %p2409
      $region74: #{tpu_custom_call.1} parent=5 // pred_check_branch
        %2412 = sbr.rel (%p2410) target = $region76
      $region75: #{tpu_custom_call.1} parent=5 // pred_region
        %s2413 = ssub.s32 %s25, 2
        // Predicated region
        $region77: #{tpu_custom_call.1} parent=75 // pred_check
          %p2414 = pneg %p290
        $region78: #{tpu_custom_call.1} parent=75 // pred_check_branch
          %2416 = sbr.rel (%p2414) target = $region80
        $region79: #{tpu_custom_call.1} parent=75 // pred_region
          %s2417 = sand.u32 %s275, 1
          %s2418 = scalar_lea.sflag [#allocation3], %s2417
          %s2419 = sand.u32 %s275, 1
          %s2420 = smul.addr %s2419, 8
          %s2421 = scalar_lea.vmem [#allocation2], %s2420
          %2422 = dma.done %s2418, 128
        $region80: #{tpu_custom_call.1} parent=75 // pred_fallthru
          _
        // Predicated region
        $region81: #{tpu_custom_call.1} parent=75 // pred_check
          %p2423 = pneg %p316
        $region82: #{tpu_custom_call.1} parent=75 // pred_check_branch
          %2425 = sbr.rel (%p2423) target = $region84
        $region83: #{tpu_custom_call.1} parent=75 // pred_region
          %s2426 = sand.u32 %s301, 1
          %s2427 = scalar_lea.sflag [#allocation5], %s2426
          %s2428 = sand.u32 %s301, 1
          %s2429 = smul.addr %s2428, 8
          %s2430 = scalar_lea.vmem [#allocation4], %s2429
          %2431 = dma.done %s2427, 128
        $region84: #{tpu_custom_call.1} parent=75 // pred_fallthru
          _
      $region76: #{tpu_custom_call.1} parent=5 // pred_fallthru
        _
    $region6: #{tpu_custom_call.1} parent=1 // loop_footer
      %s29 = sadd.s32 1, %s25
    $region7: #{tpu_custom_call.1} parent=1 // loop_footer_branch
      %24 = sbr.rel target = $region3
    $region8: #{tpu_custom_call.1} parent=1 // loop_exit
      _
    %2432 = vsyncpa [#allocation3], 1
    %s2433 = scalar_lea.sflag [#allocation3], 1
    %2434 = vsyncpa %s2433, 1
    %2435 = vsyncpa [#allocation5], 1
    %s2436 = scalar_lea.sflag [#allocation5], 1
    %2437 = vsyncpa %s2436, 1

</llo_original>
